<compile_context>
chip_gen: v7x
topology: tpu7x:2x2x1
jax: 0.10.0
libtpu: 0.0.40
codegen_flags: <defaults>
</compile_context>

<pallas_src>
import functools

import jax
import jax.numpy as jnp
from jax.experimental import pallas as pl
from jax.experimental.pallas import tpu as pltpu


# --------------------------- fused forward kernel -----------------------------
def _fused_kernel(tok_ref, fused_ref, whh_ref, bg_ref,
                  w1_ref, b1_ref, toep_ref, cb_ref,
                  w2_ref, b2_ref, out_ref, *,
                  seq_len, batch, hidden_dim, n_feat):
    S, B, H = seq_len, batch, hidden_dim
    V = fused_ref.shape[0]

    # ---- embedding gather folded into the input projection -------------------
    # one_hot @ (embedding @ W_ih.T) == gather(embedding) @ W_ih.T, exact.
    tok = tok_ref[...]                                          # (S*B, 1) int32
    vocab_iota = jax.lax.broadcasted_iota(jnp.int32, (S * B, V), 1)
    one_hot = (vocab_iota == tok).astype(jnp.float32)           # (S*B, V)
    # g-gate columns of fused_ref / bg_ref are pre-scaled by 2 (see host packing)
    gates_x = (jnp.dot(one_hot, fused_ref[...],
                       preferred_element_type=jnp.float32)
               + bg_ref[...])                                   # (S*B, 4H), vregs

    # ---- recurrence: only h @ W_hh on the serial path -------------------------
    # W_hh loaded once; loop-invariant so the MXU RHS stays resident.
    whh = whh_ref[...]                                          # (H, 4H)
    col = jax.lax.broadcasted_iota(jnp.int32, (B, 4 * H), 1)
    is_g = (col >= 2 * H) & (col < 3 * H)                       # tanh-gate lanes

    h = jnp.zeros((B, H), jnp.float32)
    c = jnp.zeros((B, H), jnp.float32)
    for t in range(S):                       # static unroll -> static slices
        gates = gates_x[t * B:(t + 1) * B, :] + jnp.dot(
            h, whh, preferred_element_type=jnp.float32)         # (B, 4H)
        # One EUP pass: tanh(x) = 2*sigmoid(2x) - 1 (g columns pre-scaled by 2).
        s = jax.nn.sigmoid(gates)
        act = jnp.where(is_g, 2.0 * s - 1.0, s)
        i_g = act[:, 0:H]
        f_g = act[:, H:2 * H]
        g_g = act[:, 2 * H:3 * H]
        o_g = act[:, 3 * H:4 * H]
        c = f_g * c + i_g * g_g
        h = o_g * jnp.tanh(c)

    # ---- fc1 ------------------------------------------------------------------
    y = (jnp.dot(h, w1_ref[...], preferred_element_type=jnp.float32)
         + b1_ref[...])                                         # (B, H)

    # ---- Conv1d bank as ONE lane-dense Toeplitz matmul ------------------------
    # toep: (H, nfF*H) with filter taps on diagonals; invalid-tail columns are
    # zero and their bias is -1e30, so ReLU maps them to exactly 0 (safe for
    # the following global max-pool, which is over non-negative values).
    conv = (jnp.dot(y, toep_ref[...], preferred_element_type=jnp.float32)
            + cb_ref[...])                                      # (B, nfF*H)
    conv = jnp.maximum(conv, 0.0)                               # ReLU
    pooled = jnp.max(conv.reshape(B, n_feat, H), axis=-1)       # (B, nfF)

    # ---- fc2 + sigmoid ---------------------------------------------------------
    logits = (jnp.dot(pooled, w2_ref[...], preferred_element_type=jnp.float32)
              + b2_ref[...])
    out_ref[...] = jax.nn.sigmoid(logits)


# --------------------------- host-side weight packing --------------------------
def _pack_toeplitz(conv_w, conv_b, filter_sizes, n_filters, H):
    """Banded weight (H, nfF*H) + masked bias (1, nfF*H) for the conv bank."""
    NEG = jnp.float32(-1e30)
    cols, biases = [], []
    j = jnp.arange(H)[:, None]                                  # (H, 1) input pos
    l = jnp.arange(H)[None, :]                                  # (1, H) output pos
    k = j - l                                                   # tap index
    for idx, fs in enumerate(filter_sizes):
        wk = conv_w[idx].reshape(n_filters, fs)                 # (F, fs)
        L = H - fs + 1
        valid = (k >= 0) & (k < fs) & (l < L)                   # (H, H)
        taps = wk[:, jnp.clip(k, 0, fs - 1)]                    # (F, H, H)
        T = jnp.where(valid[None, :, :], taps, 0.0)             # (F, H, H)
        cols.append(jnp.transpose(T, (1, 0, 2)).reshape(H, n_filters * H))
        b = conv_b[idx][:, None]                                # (F, 1)
        bmask = jnp.arange(H)[None, :] < L                      # (1, H)
        biases.append(jnp.where(bmask, b, NEG).reshape(1, n_filters * H))
    return jnp.concatenate(cols, axis=1), jnp.concatenate(biases, axis=1)


# ------------------------------ full forward ----------------------------------
def lstm_cnn_forward(tokens, params, filter_sizes, n_filters, output_dim):
    S, B = tokens.shape
    H4 = params['w_ih'].shape[0]
    H = H4 // 4
    nfF = len(filter_sizes) * n_filters

    # ---- host-side packing (layout plumbing only) ----
    tok2d = tokens.reshape(S * B, 1).astype(jnp.int32)

    # g-gate pre-scale by 2 so the kernel can use tanh(x) = 2*sigmoid(2x) - 1.
    gscale = jnp.concatenate(
        [jnp.ones((2 * H,)), jnp.full((H,), 2.0), jnp.ones((H,))]
    ).astype(jnp.float32)                                       # (4H,)

    fused = jnp.dot(params['embedding'], params['w_ih'].T) * gscale[None, :]  # (V, 4H)
    whh_t = params['w_hh'].T * gscale[None, :]                  # (H, 4H)
    b_g = ((params['b_ih'] + params['b_hh']) * gscale).reshape(1, H4)
    w1_t = params['w1'].T                                       # (H, H)
    b1 = params['b1'].reshape(1, H)
    toep, conv_bias = _pack_toeplitz(params['conv_w'], params['conv_b'],
                                     filter_sizes, n_filters, H)
    w2_t = params['w2'].T                                       # (nfF, O)
    b2 = params['b2'].reshape(1, output_dim)

    kernel = functools.partial(_fused_kernel, seq_len=S, batch=B,
                               hidden_dim=H, n_feat=nfF)
    vspec = pl.BlockSpec(memory_space=pltpu.MemorySpace.VMEM)
    return pl.pallas_call(
        kernel,
        out_shape=jax.ShapeDtypeStruct((B, output_dim), jnp.float32),
        in_specs=[vspec] * 10,
        out_specs=vspec,
    )(tok2d, fused, whh_t, b_g, w1_t, b1, toep, conv_bias, w2_t, b2)


# --------------------------- pure-JAX reference -------------------------------
def reference_forward(tokens, params, filter_sizes, n_filters, hidden_dim,
                      output_dim):
    emb = jnp.take(params['embedding'], tokens, axis=0)
    S, B, E = emb.shape
    H = hidden_dim

    def step(carry, x_t):
        h, c = carry
        gates = (x_t @ params['w_ih'].T + params['b_ih']
                 + h @ params['w_hh'].T + params['b_hh'])
        i = jax.nn.sigmoid(gates[:, :H])
        f = jax.nn.sigmoid(gates[:, H:2 * H])
        g = jnp.tanh(gates[:, 2 * H:3 * H])
        o = jax.nn.sigmoid(gates[:, 3 * H:])
        c = f * c + i * g
        h = o * jnp.tanh(c)
        return (h, c), None

    (h, _), _ = jax.lax.scan(
        step, (jnp.zeros((B, H), jnp.float32), jnp.zeros((B, H), jnp.float32)),
        emb)
    y = h @ params['w1'].T + params['b1']
    feats = []
    for idx, fs in enumerate(filter_sizes):
        w = params['conv_w'][idx].reshape(n_filters, fs)
        b = params['conv_b'][idx]
        L = H - fs + 1
        windows = jnp.stack([y[:, k:k + L] for k in range(fs)], axis=-1)
        conv = jnp.einsum('blk,fk->blf', windows, w) + b[None, None, :]
        conv = jnp.maximum(conv, 0.0)
        feats.append(jnp.max(conv, axis=1))
    feat = jnp.concatenate(feats, axis=1)
    return jax.nn.sigmoid(feat @ params['w2'].T + params['b2'])


# ----------------------------------- main --------------------------------------
if __name__ == "__main__":
    vocab_size, embedding_dim, n_filters = 50, 16, 8
    filter_sizes = [3, 4, 5]
    output_dim, hidden_dim = 2, 32
    seq_len, batch = 8, 2

    keys = iter(jax.random.split(jax.random.PRNGKey(0), 32))

    def u(shape, scale=0.1):
        return jax.random.uniform(next(keys), shape, jnp.float32, -scale, scale)

    params = {
        'embedding': u((vocab_size, embedding_dim), 1.0),
        'w_ih': u((4 * hidden_dim, embedding_dim)),
        'w_hh': u((4 * hidden_dim, hidden_dim)),
        'b_ih': u((4 * hidden_dim,)),
        'b_hh': u((4 * hidden_dim,)),
        'w1': u((hidden_dim, hidden_dim)),
        'b1': u((hidden_dim,)),
        'conv_w': [u((n_filters, 1, fs)) for fs in filter_sizes],
        'conv_b': [u((n_filters,)) for _ in filter_sizes],
        'w2': u((output_dim, len(filter_sizes) * n_filters)),
        'b2': u((output_dim,)),
    }
    tokens = jax.random.randint(next(keys), (seq_len, batch), 0, vocab_size,
                                dtype=jnp.int32)

    out = lstm_cnn_forward(tokens, params, filter_sizes, n_filters, output_dim)
    out = jax.block_until_ready(out)

    ref = reference_forward(tokens, params, filter_sizes, n_filters,
                            hidden_dim, output_dim)
    assert out.shape == (batch, output_dim)
    assert jnp.allclose(out, ref, atol=1e-4, rtol=1e-4), (out, ref)
    print("KERNEL_OK")
</pallas_src>

<mosaic_0001>
module attributes {stable_mosaic.version = 11 : i64} {
  func.func @_fused_kernel(%arg0: memref<16x1xi32, #tpu.memory_space<vmem>>, %arg1: memref<50x128xf32, #tpu.memory_space<vmem>>, %arg2: memref<32x128xf32, #tpu.memory_space<vmem>>, %arg3: memref<1x128xf32, #tpu.memory_space<vmem>>, %arg4: memref<32x32xf32, #tpu.memory_space<vmem>>, %arg5: memref<1x32xf32, #tpu.memory_space<vmem>>, %arg6: memref<32x768xf32, #tpu.memory_space<vmem>>, %arg7: memref<1x768xf32, #tpu.memory_space<vmem>>, %arg8: memref<24x2xf32, #tpu.memory_space<vmem>>, %arg9: memref<1x2xf32, #tpu.memory_space<vmem>>, %arg10: memref<2x2xf32, #tpu.memory_space<vmem>>) attributes {dimension_semantics = [], scalar_prefetch = 0 : i64, scratch_operands = 0 : i64, tpu.core_type = #tpu.core_type<tc>} {
    %c0 = arith.constant 0 : index
    %c0_0 = arith.constant 0 : index
    %0 = vector.load %arg0[%c0, %c0_0] : memref<16x1xi32, #tpu.memory_space<vmem>>, vector<16x1xi32>
    %1 = tpu.iota {dimensions = array<i32: 1>} : vector<16x50xi32>
    %2 = vector.broadcast %0 : vector<16x1xi32> to vector<16x50xi32>
    %3 = arith.cmpi eq, %1, %2 : vector<16x50xi32>
    %4 = arith.extui %3 : vector<16x50xi1> to vector<16x50xi32>
    %5 = arith.sitofp %4 : vector<16x50xi32> to vector<16x50xf32>
    %c0_1 = arith.constant 0 : index
    %c0_2 = arith.constant 0 : index
    %6 = vector.load %arg1[%c0_1, %c0_2] : memref<50x128xf32, #tpu.memory_space<vmem>>, vector<50x128xf32>
    %cst = arith.constant dense<0.000000e+00> : vector<16x128xf32>
    %7 = tpu.matmul %5, %6, %cst {dimension_numbers = #tpu.dot_dimension_numbers<[1], [0], [0], [1], [0, 0, 1, 1], [], []>} : vector<16x50xf32>, vector<50x128xf32>, vector<16x128xf32> -> vector<16x128xf32>
    %c0_3 = arith.constant 0 : index
    %c0_4 = arith.constant 0 : index
    %8 = vector.load %arg3[%c0_3, %c0_4] : memref<1x128xf32, #tpu.memory_space<vmem>>, vector<1x128xf32>
    %9 = vector.broadcast %8 : vector<1x128xf32> to vector<16x128xf32>
    %10 = arith.addf %7, %9 : vector<16x128xf32>
    %c0_5 = arith.constant 0 : index
    %c0_6 = arith.constant 0 : index
    %11 = vector.load %arg2[%c0_5, %c0_6] : memref<32x128xf32, #tpu.memory_space<vmem>>, vector<32x128xf32>
    %12 = tpu.iota {dimensions = array<i32: 1>} : vector<2x128xi32>
    %c64_i32 = arith.constant 64 : i32
    %13 = vector.broadcast %c64_i32 : i32 to vector<2x128xi32>
    %14 = arith.cmpi sge, %12, %13 : vector<2x128xi32>
    %c96_i32 = arith.constant 96 : i32
    %15 = vector.broadcast %c96_i32 : i32 to vector<2x128xi32>
    %16 = arith.cmpi slt, %12, %15 : vector<2x128xi32>
    %17 = arith.andi %14, %16 : vector<2x128xi1>
    %cst_7 = arith.constant 0.000000e+00 : f32
    %18 = vector.broadcast %cst_7 : f32 to vector<2x32xf32>
    %cst_8 = arith.constant 0.000000e+00 : f32
    %19 = vector.broadcast %cst_8 : f32 to vector<2x32xf32>
    %20 = vector.extract_strided_slice %10 {offsets = [0, 0], sizes = [2, 128], strides = [1, 1]} : vector<16x128xf32> to vector<2x128xf32>
    %cst_9 = arith.constant dense<0.000000e+00> : vector<2x128xf32>
    %21 = tpu.matmul %18, %11, %cst_9 {dimension_numbers = #tpu.dot_dimension_numbers<[1], [0], [0], [1], [0, 0, 1, 1], [], []>} : vector<2x32xf32>, vector<32x128xf32>, vector<2x128xf32> -> vector<2x128xf32>
    %22 = arith.addf %20, %21 : vector<2x128xf32>
    %23 = arith.negf %22 : vector<2x128xf32>
    %24 = math.exp %23 : vector<2x128xf32>
    %cst_10 = arith.constant 1.000000e+00 : f32
    %25 = vector.broadcast %cst_10 : f32 to vector<2x128xf32>
    %26 = arith.addf %25, %24 : vector<2x128xf32>
    %27 = arith.divf %25, %26 : vector<2x128xf32>
    %cst_11 = arith.constant 2.000000e+00 : f32
    %28 = vector.broadcast %cst_11 : f32 to vector<2x128xf32>
    %29 = arith.mulf %28, %27 : vector<2x128xf32>
    %cst_12 = arith.constant 1.000000e+00 : f32
    %30 = vector.broadcast %cst_12 : f32 to vector<2x128xf32>
    %31 = arith.subf %29, %30 : vector<2x128xf32>
    %32 = arith.select %17, %31, %27 : vector<2x128xi1>, vector<2x128xf32>
    %33 = vector.extract_strided_slice %32 {offsets = [0, 0], sizes = [2, 32], strides = [1, 1]} : vector<2x128xf32> to vector<2x32xf32>
    %34 = vector.extract_strided_slice %32 {offsets = [0, 32], sizes = [2, 32], strides = [1, 1]} : vector<2x128xf32> to vector<2x32xf32>
    %35 = vector.extract_strided_slice %32 {offsets = [0, 64], sizes = [2, 32], strides = [1, 1]} : vector<2x128xf32> to vector<2x32xf32>
    %36 = vector.extract_strided_slice %32 {offsets = [0, 96], sizes = [2, 32], strides = [1, 1]} : vector<2x128xf32> to vector<2x32xf32>
    %37 = arith.mulf %34, %19 : vector<2x32xf32>
    %38 = arith.mulf %33, %35 : vector<2x32xf32>
    %39 = arith.addf %37, %38 : vector<2x32xf32>
    %40 = math.tanh %39 : vector<2x32xf32>
    %41 = arith.mulf %36, %40 : vector<2x32xf32>
    %42 = vector.extract_strided_slice %10 {offsets = [2, 0], sizes = [2, 128], strides = [1, 1]} : vector<16x128xf32> to vector<2x128xf32>
    %cst_13 = arith.constant dense<0.000000e+00> : vector<2x128xf32>
    %43 = tpu.matmul %41, %11, %cst_13 {dimension_numbers = #tpu.dot_dimension_numbers<[1], [0], [0], [1], [0, 0, 1, 1], [], []>} : vector<2x32xf32>, vector<32x128xf32>, vector<2x128xf32> -> vector<2x128xf32>
    %44 = arith.addf %42, %43 : vector<2x128xf32>
    %45 = arith.negf %44 : vector<2x128xf32>
    %46 = math.exp %45 : vector<2x128xf32>
    %cst_14 = arith.constant 1.000000e+00 : f32
    %47 = vector.broadcast %cst_14 : f32 to vector<2x128xf32>
    %48 = arith.addf %47, %46 : vector<2x128xf32>
    %49 = arith.divf %47, %48 : vector<2x128xf32>
    %cst_15 = arith.constant 2.000000e+00 : f32
    %50 = vector.broadcast %cst_15 : f32 to vector<2x128xf32>
    %51 = arith.mulf %50, %49 : vector<2x128xf32>
    %cst_16 = arith.constant 1.000000e+00 : f32
    %52 = vector.broadcast %cst_16 : f32 to vector<2x128xf32>
    %53 = arith.subf %51, %52 : vector<2x128xf32>
    %54 = arith.select %17, %53, %49 : vector<2x128xi1>, vector<2x128xf32>
    %55 = vector.extract_strided_slice %54 {offsets = [0, 0], sizes = [2, 32], strides = [1, 1]} : vector<2x128xf32> to vector<2x32xf32>
    %56 = vector.extract_strided_slice %54 {offsets = [0, 32], sizes = [2, 32], strides = [1, 1]} : vector<2x128xf32> to vector<2x32xf32>
    %57 = vector.extract_strided_slice %54 {offsets = [0, 64], sizes = [2, 32], strides = [1, 1]} : vector<2x128xf32> to vector<2x32xf32>
    %58 = vector.extract_strided_slice %54 {offsets = [0, 96], sizes = [2, 32], strides = [1, 1]} : vector<2x128xf32> to vector<2x32xf32>
    %59 = arith.mulf %56, %39 : vector<2x32xf32>
    %60 = arith.mulf %55, %57 : vector<2x32xf32>
    %61 = arith.addf %59, %60 : vector<2x32xf32>
    %62 = math.tanh %61 : vector<2x32xf32>
    %63 = arith.mulf %58, %62 : vector<2x32xf32>
    %64 = vector.extract_strided_slice %10 {offsets = [4, 0], sizes = [2, 128], strides = [1, 1]} : vector<16x128xf32> to vector<2x128xf32>
    %cst_17 = arith.constant dense<0.000000e+00> : vector<2x128xf32>
    %65 = tpu.matmul %63, %11, %cst_17 {dimension_numbers = #tpu.dot_dimension_numbers<[1], [0], [0], [1], [0, 0, 1, 1], [], []>} : vector<2x32xf32>, vector<32x128xf32>, vector<2x128xf32> -> vector<2x128xf32>
    %66 = arith.addf %64, %65 : vector<2x128xf32>
    %67 = arith.negf %66 : vector<2x128xf32>
    %68 = math.exp %67 : vector<2x128xf32>
    %cst_18 = arith.constant 1.000000e+00 : f32
    %69 = vector.broadcast %cst_18 : f32 to vector<2x128xf32>
    %70 = arith.addf %69, %68 : vector<2x128xf32>
    %71 = arith.divf %69, %70 : vector<2x128xf32>
    %cst_19 = arith.constant 2.000000e+00 : f32
    %72 = vector.broadcast %cst_19 : f32 to vector<2x128xf32>
    %73 = arith.mulf %72, %71 : vector<2x128xf32>
    %cst_20 = arith.constant 1.000000e+00 : f32
    %74 = vector.broadcast %cst_20 : f32 to vector<2x128xf32>
    %75 = arith.subf %73, %74 : vector<2x128xf32>
    %76 = arith.select %17, %75, %71 : vector<2x128xi1>, vector<2x128xf32>
    %77 = vector.extract_strided_slice %76 {offsets = [0, 0], sizes = [2, 32], strides = [1, 1]} : vector<2x128xf32> to vector<2x32xf32>
    %78 = vector.extract_strided_slice %76 {offsets = [0, 32], sizes = [2, 32], strides = [1, 1]} : vector<2x128xf32> to vector<2x32xf32>
    %79 = vector.extract_strided_slice %76 {offsets = [0, 64], sizes = [2, 32], strides = [1, 1]} : vector<2x128xf32> to vector<2x32xf32>
    %80 = vector.extract_strided_slice %76 {offsets = [0, 96], sizes = [2, 32], strides = [1, 1]} : vector<2x128xf32> to vector<2x32xf32>
    %81 = arith.mulf %78, %61 : vector<2x32xf32>
    %82 = arith.mulf %77, %79 : vector<2x32xf32>
    %83 = arith.addf %81, %82 : vector<2x32xf32>
    %84 = math.tanh %83 : vector<2x32xf32>
    %85 = arith.mulf %80, %84 : vector<2x32xf32>
    %86 = vector.extract_strided_slice %10 {offsets = [6, 0], sizes = [2, 128], strides = [1, 1]} : vector<16x128xf32> to vector<2x128xf32>
    %cst_21 = arith.constant dense<0.000000e+00> : vector<2x128xf32>
    %87 = tpu.matmul %85, %11, %cst_21 {dimension_numbers = #tpu.dot_dimension_numbers<[1], [0], [0], [1], [0, 0, 1, 1], [], []>} : vector<2x32xf32>, vector<32x128xf32>, vector<2x128xf32> -> vector<2x128xf32>
    %88 = arith.addf %86, %87 : vector<2x128xf32>
    %89 = arith.negf %88 : vector<2x128xf32>
    %90 = math.exp %89 : vector<2x128xf32>
    %cst_22 = arith.constant 1.000000e+00 : f32
    %91 = vector.broadcast %cst_22 : f32 to vector<2x128xf32>
    %92 = arith.addf %91, %90 : vector<2x128xf32>
    %93 = arith.divf %91, %92 : vector<2x128xf32>
    %cst_23 = arith.constant 2.000000e+00 : f32
    %94 = vector.broadcast %cst_23 : f32 to vector<2x128xf32>
    %95 = arith.mulf %94, %93 : vector<2x128xf32>
    %cst_24 = arith.constant 1.000000e+00 : f32
    %96 = vector.broadcast %cst_24 : f32 to vector<2x128xf32>
    %97 = arith.subf %95, %96 : vector<2x128xf32>
    %98 = arith.select %17, %97, %93 : vector<2x128xi1>, vector<2x128xf32>
    %99 = vector.extract_strided_slice %98 {offsets = [0, 0], sizes = [2, 32], strides = [1, 1]} : vector<2x128xf32> to vector<2x32xf32>
    %100 = vector.extract_strided_slice %98 {offsets = [0, 32], sizes = [2, 32], strides = [1, 1]} : vector<2x128xf32> to vector<2x32xf32>
    %101 = vector.extract_strided_slice %98 {offsets = [0, 64], sizes = [2, 32], strides = [1, 1]} : vector<2x128xf32> to vector<2x32xf32>
    %102 = vector.extract_strided_slice %98 {offsets = [0, 96], sizes = [2, 32], strides = [1, 1]} : vector<2x128xf32> to vector<2x32xf32>
    %103 = arith.mulf %100, %83 : vector<2x32xf32>
    %104 = arith.mulf %99, %101 : vector<2x32xf32>
    %105 = arith.addf %103, %104 : vector<2x32xf32>
    %106 = math.tanh %105 : vector<2x32xf32>
    %107 = arith.mulf %102, %106 : vector<2x32xf32>
    %108 = vector.extract_strided_slice %10 {offsets = [8, 0], sizes = [2, 128], strides = [1, 1]} : vector<16x128xf32> to vector<2x128xf32>
    %cst_25 = arith.constant dense<0.000000e+00> : vector<2x128xf32>
    %109 = tpu.matmul %107, %11, %cst_25 {dimension_numbers = #tpu.dot_dimension_numbers<[1], [0], [0], [1], [0, 0, 1, 1], [], []>} : vector<2x32xf32>, vector<32x128xf32>, vector<2x128xf32> -> vector<2x128xf32>
    %110 = arith.addf %108, %109 : vector<2x128xf32>
    %111 = arith.negf %110 : vector<2x128xf32>
    %112 = math.exp %111 : vector<2x128xf32>
    %cst_26 = arith.constant 1.000000e+00 : f32
    %113 = vector.broadcast %cst_26 : f32 to vector<2x128xf32>
    %114 = arith.addf %113, %112 : vector<2x128xf32>
    %115 = arith.divf %113, %114 : vector<2x128xf32>
    %cst_27 = arith.constant 2.000000e+00 : f32
    %116 = vector.broadcast %cst_27 : f32 to vector<2x128xf32>
    %117 = arith.mulf %116, %115 : vector<2x128xf32>
    %cst_28 = arith.constant 1.000000e+00 : f32
    %118 = vector.broadcast %cst_28 : f32 to vector<2x128xf32>
    %119 = arith.subf %117, %118 : vector<2x128xf32>
    %120 = arith.select %17, %119, %115 : vector<2x128xi1>, vector<2x128xf32>
    %121 = vector.extract_strided_slice %120 {offsets = [0, 0], sizes = [2, 32], strides = [1, 1]} : vector<2x128xf32> to vector<2x32xf32>
    %122 = vector.extract_strided_slice %120 {offsets = [0, 32], sizes = [2, 32], strides = [1, 1]} : vector<2x128xf32> to vector<2x32xf32>
    %123 = vector.extract_strided_slice %120 {offsets = [0, 64], sizes = [2, 32], strides = [1, 1]} : vector<2x128xf32> to vector<2x32xf32>
    %124 = vector.extract_strided_slice %120 {offsets = [0, 96], sizes = [2, 32], strides = [1, 1]} : vector<2x128xf32> to vector<2x32xf32>
    %125 = arith.mulf %122, %105 : vector<2x32xf32>
    %126 = arith.mulf %121, %123 : vector<2x32xf32>
    %127 = arith.addf %125, %126 : vector<2x32xf32>
    %128 = math.tanh %127 : vector<2x32xf32>
    %129 = arith.mulf %124, %128 : vector<2x32xf32>
    %130 = vector.extract_strided_slice %10 {offsets = [10, 0], sizes = [2, 128], strides = [1, 1]} : vector<16x128xf32> to vector<2x128xf32>
    %cst_29 = arith.constant dense<0.000000e+00> : vector<2x128xf32>
    %131 = tpu.matmul %129, %11, %cst_29 {dimension_numbers = #tpu.dot_dimension_numbers<[1], [0], [0], [1], [0, 0, 1, 1], [], []>} : vector<2x32xf32>, vector<32x128xf32>, vector<2x128xf32> -> vector<2x128xf32>
    %132 = arith.addf %130, %131 : vector<2x128xf32>
    %133 = arith.negf %132 : vector<2x128xf32>
    %134 = math.exp %133 : vector<2x128xf32>
    %cst_30 = arith.constant 1.000000e+00 : f32
    %135 = vector.broadcast %cst_30 : f32 to vector<2x128xf32>
    %136 = arith.addf %135, %134 : vector<2x128xf32>
    %137 = arith.divf %135, %136 : vector<2x128xf32>
    %cst_31 = arith.constant 2.000000e+00 : f32
    %138 = vector.broadcast %cst_31 : f32 to vector<2x128xf32>
    %139 = arith.mulf %138, %137 : vector<2x128xf32>
    %cst_32 = arith.constant 1.000000e+00 : f32
    %140 = vector.broadcast %cst_32 : f32 to vector<2x128xf32>
    %141 = arith.subf %139, %140 : vector<2x128xf32>
    %142 = arith.select %17, %141, %137 : vector<2x128xi1>, vector<2x128xf32>
    %143 = vector.extract_strided_slice %142 {offsets = [0, 0], sizes = [2, 32], strides = [1, 1]} : vector<2x128xf32> to vector<2x32xf32>
    %144 = vector.extract_strided_slice %142 {offsets = [0, 32], sizes = [2, 32], strides = [1, 1]} : vector<2x128xf32> to vector<2x32xf32>
    %145 = vector.extract_strided_slice %142 {offsets = [0, 64], sizes = [2, 32], strides = [1, 1]} : vector<2x128xf32> to vector<2x32xf32>
    %146 = vector.extract_strided_slice %142 {offsets = [0, 96], sizes = [2, 32], strides = [1, 1]} : vector<2x128xf32> to vector<2x32xf32>
    %147 = arith.mulf %144, %127 : vector<2x32xf32>
    %148 = arith.mulf %143, %145 : vector<2x32xf32>
    %149 = arith.addf %147, %148 : vector<2x32xf32>
    %150 = math.tanh %149 : vector<2x32xf32>
    %151 = arith.mulf %146, %150 : vector<2x32xf32>
    %152 = vector.extract_strided_slice %10 {offsets = [12, 0], sizes = [2, 128], strides = [1, 1]} : vector<16x128xf32> to vector<2x128xf32>
    %cst_33 = arith.constant dense<0.000000e+00> : vector<2x128xf32>
    %153 = tpu.matmul %151, %11, %cst_33 {dimension_numbers = #tpu.dot_dimension_numbers<[1], [0], [0], [1], [0, 0, 1, 1], [], []>} : vector<2x32xf32>, vector<32x128xf32>, vector<2x128xf32> -> vector<2x128xf32>
    %154 = arith.addf %152, %153 : vector<2x128xf32>
    %155 = arith.negf %154 : vector<2x128xf32>
    %156 = math.exp %155 : vector<2x128xf32>
    %cst_34 = arith.constant 1.000000e+00 : f32
    %157 = vector.broadcast %cst_34 : f32 to vector<2x128xf32>
    %158 = arith.addf %157, %156 : vector<2x128xf32>
    %159 = arith.divf %157, %158 : vector<2x128xf32>
    %cst_35 = arith.constant 2.000000e+00 : f32
    %160 = vector.broadcast %cst_35 : f32 to vector<2x128xf32>
    %161 = arith.mulf %160, %159 : vector<2x128xf32>
    %cst_36 = arith.constant 1.000000e+00 : f32
    %162 = vector.broadcast %cst_36 : f32 to vector<2x128xf32>
    %163 = arith.subf %161, %162 : vector<2x128xf32>
    %164 = arith.select %17, %163, %159 : vector<2x128xi1>, vector<2x128xf32>
    %165 = vector.extract_strided_slice %164 {offsets = [0, 0], sizes = [2, 32], strides = [1, 1]} : vector<2x128xf32> to vector<2x32xf32>
    %166 = vector.extract_strided_slice %164 {offsets = [0, 32], sizes = [2, 32], strides = [1, 1]} : vector<2x128xf32> to vector<2x32xf32>
    %167 = vector.extract_strided_slice %164 {offsets = [0, 64], sizes = [2, 32], strides = [1, 1]} : vector<2x128xf32> to vector<2x32xf32>
    %168 = vector.extract_strided_slice %164 {offsets = [0, 96], sizes = [2, 32], strides = [1, 1]} : vector<2x128xf32> to vector<2x32xf32>
    %169 = arith.mulf %166, %149 : vector<2x32xf32>
    %170 = arith.mulf %165, %167 : vector<2x32xf32>
    %171 = arith.addf %169, %170 : vector<2x32xf32>
    %172 = math.tanh %171 : vector<2x32xf32>
    %173 = arith.mulf %168, %172 : vector<2x32xf32>
    %174 = vector.extract_strided_slice %10 {offsets = [14, 0], sizes = [2, 128], strides = [1, 1]} : vector<16x128xf32> to vector<2x128xf32>
    %cst_37 = arith.constant dense<0.000000e+00> : vector<2x128xf32>
    %175 = tpu.matmul %173, %11, %cst_37 {dimension_numbers = #tpu.dot_dimension_numbers<[1], [0], [0], [1], [0, 0, 1, 1], [], []>} : vector<2x32xf32>, vector<32x128xf32>, vector<2x128xf32> -> vector<2x128xf32>
    %176 = arith.addf %174, %175 : vector<2x128xf32>
    %177 = arith.negf %176 : vector<2x128xf32>
    %178 = math.exp %177 : vector<2x128xf32>
    %cst_38 = arith.constant 1.000000e+00 : f32
    %179 = vector.broadcast %cst_38 : f32 to vector<2x128xf32>
    %180 = arith.addf %179, %178 : vector<2x128xf32>
    %181 = arith.divf %179, %180 : vector<2x128xf32>
    %cst_39 = arith.constant 2.000000e+00 : f32
    %182 = vector.broadcast %cst_39 : f32 to vector<2x128xf32>
    %183 = arith.mulf %182, %181 : vector<2x128xf32>
    %cst_40 = arith.constant 1.000000e+00 : f32
    %184 = vector.broadcast %cst_40 : f32 to vector<2x128xf32>
    %185 = arith.subf %183, %184 : vector<2x128xf32>
    %186 = arith.select %17, %185, %181 : vector<2x128xi1>, vector<2x128xf32>
    %187 = vector.extract_strided_slice %186 {offsets = [0, 0], sizes = [2, 32], strides = [1, 1]} : vector<2x128xf32> to vector<2x32xf32>
    %188 = vector.extract_strided_slice %186 {offsets = [0, 32], sizes = [2, 32], strides = [1, 1]} : vector<2x128xf32> to vector<2x32xf32>
    %189 = vector.extract_strided_slice %186 {offsets = [0, 64], sizes = [2, 32], strides = [1, 1]} : vector<2x128xf32> to vector<2x32xf32>
    %190 = vector.extract_strided_slice %186 {offsets = [0, 96], sizes = [2, 32], strides = [1, 1]} : vector<2x128xf32> to vector<2x32xf32>
    %191 = arith.mulf %188, %171 : vector<2x32xf32>
    %192 = arith.mulf %187, %189 : vector<2x32xf32>
    %193 = arith.addf %191, %192 : vector<2x32xf32>
    %194 = math.tanh %193 : vector<2x32xf32>
    %195 = arith.mulf %190, %194 : vector<2x32xf32>
    %c0_41 = arith.constant 0 : index
    %c0_42 = arith.constant 0 : index
    %196 = vector.load %arg4[%c0_41, %c0_42] : memref<32x32xf32, #tpu.memory_space<vmem>>, vector<32x32xf32>
    %cst_43 = arith.constant dense<0.000000e+00> : vector<2x32xf32>
    %197 = tpu.matmul %195, %196, %cst_43 {dimension_numbers = #tpu.dot_dimension_numbers<[1], [0], [0], [1], [0, 0, 1, 1], [], []>} : vector<2x32xf32>, vector<32x32xf32>, vector<2x32xf32> -> vector<2x32xf32>
    %c0_44 = arith.constant 0 : index
    %c0_45 = arith.constant 0 : index
    %198 = vector.load %arg5[%c0_44, %c0_45] : memref<1x32xf32, #tpu.memory_space<vmem>>, vector<1x32xf32>
    %199 = vector.broadcast %198 : vector<1x32xf32> to vector<2x32xf32>
    %200 = arith.addf %197, %199 : vector<2x32xf32>
    %c0_46 = arith.constant 0 : index
    %c0_47 = arith.constant 0 : index
    %201 = vector.load %arg6[%c0_46, %c0_47] : memref<32x768xf32, #tpu.memory_space<vmem>>, vector<32x768xf32>
    %cst_48 = arith.constant dense<0.000000e+00> : vector<2x768xf32>
    %202 = tpu.matmul %200, %201, %cst_48 {dimension_numbers = #tpu.dot_dimension_numbers<[1], [0], [0], [1], [0, 0, 1, 1], [], []>} : vector<2x32xf32>, vector<32x768xf32>, vector<2x768xf32> -> vector<2x768xf32>
    %c0_49 = arith.constant 0 : index
    %c0_50 = arith.constant 0 : index
    %203 = vector.load %arg7[%c0_49, %c0_50] : memref<1x768xf32, #tpu.memory_space<vmem>>, vector<1x768xf32>
    %204 = vector.broadcast %203 : vector<1x768xf32> to vector<2x768xf32>
    %205 = arith.addf %202, %204 : vector<2x768xf32>
    %cst_51 = arith.constant 0.000000e+00 : f32
    %206 = vector.broadcast %cst_51 : f32 to vector<2x768xf32>
    %207 = arith.maximumf %205, %206 : vector<2x768xf32>
    %208 = vector.shape_cast %207 : vector<2x768xf32> to vector<2x24x32xf32>
    %cst_52 = arith.constant dense<0xFF800000> : vector<2x24xf32>
    %209 = vector.multi_reduction <maximumf>, %208, %cst_52 [2] : vector<2x24x32xf32> to vector<2x24xf32>
    %c0_53 = arith.constant 0 : index
    %c0_54 = arith.constant 0 : index
    %210 = vector.load %arg8[%c0_53, %c0_54] : memref<24x2xf32, #tpu.memory_space<vmem>>, vector<24x2xf32>
    %cst_55 = arith.constant dense<0.000000e+00> : vector<2x2xf32>
    %211 = tpu.matmul %209, %210, %cst_55 {dimension_numbers = #tpu.dot_dimension_numbers<[1], [0], [0], [1], [0, 0, 1, 1], [], []>} : vector<2x24xf32>, vector<24x2xf32>, vector<2x2xf32> -> vector<2x2xf32>
    %c0_56 = arith.constant 0 : index
    %c0_57 = arith.constant 0 : index
    %212 = vector.load %arg9[%c0_56, %c0_57] : memref<1x2xf32, #tpu.memory_space<vmem>>, vector<1x2xf32>
    %213 = vector.broadcast %212 : vector<1x2xf32> to vector<2x2xf32>
    %214 = arith.addf %211, %213 : vector<2x2xf32>
    %215 = arith.negf %214 : vector<2x2xf32>
    %216 = math.exp %215 : vector<2x2xf32>
    %cst_58 = arith.constant 1.000000e+00 : f32
    %217 = vector.broadcast %cst_58 : f32 to vector<2x2xf32>
    %218 = arith.addf %217, %216 : vector<2x2xf32>
    %219 = arith.divf %217, %218 : vector<2x2xf32>
    %c0_59 = arith.constant 0 : index
    %c0_60 = arith.constant 0 : index
    %220 = vector.load %arg10[%c0_59, %c0_60] : memref<2x2xf32, #tpu.memory_space<vmem>>, vector<2x2xf32>
    tpu.vector_store %arg10[%c0_59, %c0_60], %219 {strides = array<i32>} : memref<2x2xf32, #tpu.memory_space<vmem>>, vector<2x2xf32>,
    return
  }
}

</mosaic_0001>

<llo_original>
// kernel: tpu_custom_call.1
$region0: #{tpu_custom_call.1}
  #allocation0 [shape = 'u32[]', space=smem, size = 0x4, offset = 0x4, fixed_abs, tag = 'smem constant byte address 0x4 - core index']
  #allocation1 [shape = 'u32[144,128]{1,0:T(1,128)}', space=vmem, size = 0x12000, scoped, tag = 'internal scratch']
  %s0 = inlined_call_operand.vmem [shape: s32[16,1], index: 0, kind: input, shape index: {}]
  %s1 = inlined_call_operand.hbm [shape: f32[50,128], index: 1, kind: input, shape index: {}]
  %s2 = inlined_call_operand.vmem [shape: f32[32,128], index: 2, kind: input, shape index: {}]
  %s3 = inlined_call_operand.vmem [shape: f32[1,128], index: 3, kind: input, shape index: {}]
  %s4 = inlined_call_operand.hbm [shape: f32[32,32], index: 4, kind: input, shape index: {}]
  %s5 = inlined_call_operand.vmem [shape: f32[1,32], index: 5, kind: input, shape index: {}]
  %s6 = inlined_call_operand.hbm [shape: f32[32,768], index: 6, kind: input, shape index: {}]
  %s7 = inlined_call_operand.vmem [shape: f32[1,768], index: 7, kind: input, shape index: {}]
  %s8 = inlined_call_operand.vmem [shape: f32[24,2], index: 8, kind: input, shape index: {}]
  %s9 = inlined_call_operand.vmem [shape: f32[1,2], index: 9, kind: input, shape index: {}]
  %s10 = inlined_call_operand.hbm [shape: f32[2,2], index: 10, kind: output, shape index: {}]
  %s11 = sld [smem:[#allocation0]]
  $region62: #{tpu_custom_call.1} parent=0
    _
  %s13 = ssub.s32 1, %s11
  %s14 = scalar_select 0, %s13, %s11
  $region1: #{tpu_custom_call.1} parent=0
    #allocation2 [shape = 'u8[28672]{0}', space=vmem, size = 0x7000, scoped, tag = 'input window, operand 1, single buffered']
    #allocation3 [shape = 's32[1]{0}', space=sflag, size = 0x4, scoped, tag = 'scoped memory for tpu_custom_call.1']
    #allocation4 [shape = 's32[1]{0}', space=sflag, size = 0x4, scoped, tag = 'scoped memory for tpu_custom_call.1']
    #allocation5 [shape = 'u8[16384]{0}', space=vmem, size = 0x4000, scoped, tag = 'input window, operand 4, single buffered']
    #allocation6 [shape = 's32[1]{0}', space=sflag, size = 0x4, scoped, tag = 'scoped memory for tpu_custom_call.1']
    #allocation7 [shape = 'u8[98304]{0}', space=vmem, size = 0x18000, scoped, tag = 'input window, operand 6, single buffered']
    #allocation8 [shape = 'u8[1024]{0}', space=vmem, size = 0x400, scoped, tag = 'output window, operand 0, single buffered']
    %15 = vsyncpa [#allocation3], 0
    %16 = vsyncpa [#allocation6], 0
    %17 = vsyncpa [#allocation4], 0
    // Predicated region
    $region2: #{tpu_custom_call.1} parent=1 // pred_check
      _
    $region3: #{tpu_custom_call.1} parent=1 // pred_check_branch
      %19 = sbr.rel (0) target = $region5
    $region4: #{tpu_custom_call.1} parent=1 // pred_region
      _
    $region5: #{tpu_custom_call.1} parent=1 // pred_fallthru
      _
    // Predicated region
    $region6: #{tpu_custom_call.1} parent=1 // pred_check
      _
    $region7: #{tpu_custom_call.1} parent=1 // pred_check_branch
      %21 = sbr.rel (0) target = $region9
    $region8: #{tpu_custom_call.1} parent=1 // pred_region
      %s23 = ssub.s32 896, 896
      %24 = vsyncadd [#allocation3], %s23
      %s25 = sshll.u32 [#allocation2], 4
      %s26 = int_to_ptr.vmem [resolvable:$true] %s25
      %31 = dma.hbm_to_vmem [thread:$0]  %s1, 896, %s26, [#allocation3], 128, 128, 8
    $region9: #{tpu_custom_call.1} parent=1 // pred_fallthru
      _
    // Predicated region
    $region10: #{tpu_custom_call.1} parent=1 // pred_check
      _
    $region11: #{tpu_custom_call.1} parent=1 // pred_check_branch
      %33 = sbr.rel (0) target = $region13
    $region12: #{tpu_custom_call.1} parent=1 // pred_region
      _
    $region13: #{tpu_custom_call.1} parent=1 // pred_fallthru
      _
    // Predicated region
    $region14: #{tpu_custom_call.1} parent=1 // pred_check
      _
    $region15: #{tpu_custom_call.1} parent=1 // pred_check_branch
      %35 = sbr.rel (0) target = $region17
    $region16: #{tpu_custom_call.1} parent=1 // pred_region
      _
    $region17: #{tpu_custom_call.1} parent=1 // pred_fallthru
      _
    // Predicated region
    $region18: #{tpu_custom_call.1} parent=1 // pred_check
      _
    $region19: #{tpu_custom_call.1} parent=1 // pred_check_branch
      %37 = sbr.rel (0) target = $region21
    $region20: #{tpu_custom_call.1} parent=1 // pred_region
      %s39 = ssub.s32 512, 512
      %40 = vsyncadd [#allocation6], %s39
      %s41 = sshll.u32 [#allocation5], 4
      %s42 = int_to_ptr.vmem [resolvable:$true] %s41
      %47 = dma.hbm_to_vmem [thread:$0]  %s4, 512, %s42, [#allocation6], 128, 128, 8
    $region21: #{tpu_custom_call.1} parent=1 // pred_fallthru
      _
    // Predicated region
    $region22: #{tpu_custom_call.1} parent=1 // pred_check
      _
    $region23: #{tpu_custom_call.1} parent=1 // pred_check_branch
      %49 = sbr.rel (0) target = $region25
    $region24: #{tpu_custom_call.1} parent=1 // pred_region
      _
    $region25: #{tpu_custom_call.1} parent=1 // pred_fallthru
      _
    // Predicated region
    $region26: #{tpu_custom_call.1} parent=1 // pred_check
      _
    $region27: #{tpu_custom_call.1} parent=1 // pred_check_branch
      %51 = sbr.rel (0) target = $region29
    $region28: #{tpu_custom_call.1} parent=1 // pred_region
      %s53 = ssub.s32 3072, 3072
      %54 = vsyncadd [#allocation6], %s53
      %s55 = sshll.u32 [#allocation7], 4
      %s56 = int_to_ptr.vmem [resolvable:$true] %s55
      %61 = dma.hbm_to_vmem [thread:$0]  %s6, 3072, %s56, [#allocation6], 768, 768, 48
    $region29: #{tpu_custom_call.1} parent=1 // pred_fallthru
      _
    // Predicated region
    $region30: #{tpu_custom_call.1} parent=1 // pred_check
      _
    $region31: #{tpu_custom_call.1} parent=1 // pred_check_branch
      %63 = sbr.rel (0) target = $region33
    $region32: #{tpu_custom_call.1} parent=1 // pred_region
      _
    $region33: #{tpu_custom_call.1} parent=1 // pred_fallthru
      _
    // Predicated region
    $region34: #{tpu_custom_call.1} parent=1 // pred_check
      _
    $region35: #{tpu_custom_call.1} parent=1 // pred_check_branch
      %65 = sbr.rel (0) target = $region37
    $region36: #{tpu_custom_call.1} parent=1 // pred_region
      _
    $region37: #{tpu_custom_call.1} parent=1 // pred_fallthru
      _
    // Predicated region
    $region38: #{tpu_custom_call.1} parent=1 // pred_check
      _
    $region39: #{tpu_custom_call.1} parent=1 // pred_check_branch
      %67 = sbr.rel (0) target = $region41
    $region40: #{tpu_custom_call.1} parent=1 // pred_region
      _
    $region41: #{tpu_custom_call.1} parent=1 // pred_fallthru
      _
    // Predicated region
    $region42: #{tpu_custom_call.1} parent=1 // pred_check
      _
    $region43: #{tpu_custom_call.1} parent=1 // pred_check_branch
      %69 = sbr.rel (0) target = $region45
    $region44: #{tpu_custom_call.1} parent=1 // pred_region
      %70 = dma.done [#allocation3], 896
    $region45: #{tpu_custom_call.1} parent=1 // pred_fallthru
      _
    // Predicated region
    $region46: #{tpu_custom_call.1} parent=1 // pred_check
      _
    $region47: #{tpu_custom_call.1} parent=1 // pred_check_branch
      %72 = sbr.rel (0) target = $region49
    $region48: #{tpu_custom_call.1} parent=1 // pred_region
      %73 = dma.done [#allocation6], 512
    $region49: #{tpu_custom_call.1} parent=1 // pred_fallthru
      _
    // Predicated region
    $region50: #{tpu_custom_call.1} parent=1 // pred_check
      _
    $region51: #{tpu_custom_call.1} parent=1 // pred_check_branch
      %75 = sbr.rel (0) target = $region53
    $region52: #{tpu_custom_call.1} parent=1 // pred_region
      %76 = dma.done [#allocation6], 3072
    $region53: #{tpu_custom_call.1} parent=1 // pred_fallthru
      _
    %v77 = vld [vmem:[%s0] sm:$0xff]
    %v78 = vld [vmem:[%s0 + $0x8] sm:$0xff]
    %v79 = vlaneseq
    %v80 = vand.u32 %v79, 127
    %81 = vset.pattern.permute.xlu0 0
    %82 = vperm.xlu0 %81, %v77
    %v83 = vpop.permute.xlu0 %82
    %84 = vset.pattern.permute.xlu0 0
    %85 = vperm.xlu0 %84, %v78
    %v86 = vpop.permute.xlu0 %85
    %vm87 = vcmp.eq.s32.totalorder %v80, %v83
    %vm88 = vcmp.eq.s32.totalorder %v80, %v86
    %v89 = vsel %vm87, 1, 0
    %v90 = vsel %vm88, 1, 0
    %v91 = vcvt.s32.f32 %v89
    %v92 = vcvt.s32.f32 %v90
    %v93 = vld [vmem:[#allocation2] sm:$0xff]
    %v94 = vld [vmem:[#allocation2 + $0x8] sm:$0xff]
    %v95 = vld [vmem:[#allocation2 + $0x10] sm:$0xff]
    %v96 = vld [vmem:[#allocation2 + $0x18] sm:$0xff]
    %v97 = vld [vmem:[#allocation2 + $0x20] sm:$0xff]
    %v98 = vld [vmem:[#allocation2 + $0x28] sm:$0xff]
    %v99 = vld [vmem:[#allocation2 + $0x30] sm:$0x3]
    %v100 = vld [vmem:[%s3] sm:$0x1]
    %v102 = vlaneseq
    %v103 = vshrl.u32 %v102, 7
    %v104 = vsub.s32 0, %v103
    %v105 = vrot.slane %v100, %v104
    %vm107 = vcmask 408576
    %v109 = vsel %vm107, %v91, 0
    %v112 = vsel %vm107, %v92, 0
    %vm114 = vcmask 1041408
    %v116 = vsel %vm114, %v99, 0
    %118 = vmatprep.subr.mxu0 0.0
    %119 = vmatpush1.msra.mxu0 %v93
    %120 = vmatprep.subr.mxu0 0.0
    %121 = vmatpush1.msra.mxu0 %v94
    %122 = vmatprep.subr.mxu0 0.0
    %123 = vmatpush1.msra.mxu0 %v95
    %124 = vmatprep.subr.mxu0 0.0
    %125 = vmatpush1.msra.mxu0 %v96
    %126 = vmatprep.subr.mxu0 0.0
    %127 = vmatpush1.msra.mxu0 %v97
    %128 = vmatprep.subr.mxu0 0.0
    %129 = vmatpush1.msra.mxu0 %v98
    %130 = vmatprep.subr.mxu0 0.0
    %131 = vmatpush1.msra.mxu0 %v116
    %132 = vmatprep.subr.mxu0 0.0
    %133 = vmatpush1.msra.mxu0 0.0
    %134 = vmatprep.subr.mxu0 0.0
    %135 = vmatpush1.msra.mxu0 0.0
    %136 = vmatprep.subr.mxu0 0.0
    %137 = vmatpush1.msra.mxu0 0.0
    %138 = vmatprep.subr.mxu0 0.0
    %139 = vmatpush1.msra.mxu0 0.0
    %140 = vmatprep.subr.mxu0 0.0
    %141 = vmatpush1.msra.mxu0 0.0
    %142 = vmatprep.subr.mxu0 0.0
    %143 = vmatpush1.msra.mxu0 0.0
    %144 = vmatprep.subr.mxu0 0.0
    %145 = vmatpush1.msra.mxu0 0.0
    %146 = vmatprep.subr.mxu0 0.0
    %147 = vmatpush1.msra.mxu0 0.0
    %148 = vmatprep.subr.mxu0 0.0
    %149 = vmatpush1.msra.mxu0 0.0
    %150 = vmatprep.subr.mxu0 0.0
    %151 = vmatpush1.msra.mxu0 0.0
    %152 = vmatprep.subr.mxu0 0.0
    %153 = vmatpush1.msra.mxu0 0.0
    %154 = vmatprep.subr.mxu0 0.0
    %155 = vmatpush1.msra.mxu0 0.0
    %156 = vmatprep.subr.mxu0 0.0
    %157 = vmatpush1.msra.mxu0 0.0
    %158 = vmatprep.subr.mxu0 0.0
    %159 = vmatpush1.msra.mxu0 0.0
    %160 = vmatprep.subr.mxu0 0.0
    %161 = vmatpush1.msra.mxu0 0.0
    %162 = vmatprep.subr.mxu0 0.0
    %163 = vmatpush1.msra.mxu0 0.0
    %164 = vmatprep.subr.mxu0 0.0
    %165 = vmatpush1.msra.mxu0 0.0
    %166 = vmatprep.subr.mxu0 0.0
    %167 = vmatpush1.msra.mxu0 0.0
    %168 = vmatprep.subr.mxu0 0.0
    %169 = vmatpush1.msra.mxu0 0.0
    %170 = vmatprep.subr.mxu0 0.0
    %171 = vmatpush1.msra.mxu0 0.0
    %172 = vmatprep.subr.mxu0 0.0
    %173 = vmatpush1.msra.mxu0 0.0
    %174 = vmatprep.subr.mxu0 0.0
    %175 = vmatpush1.msra.mxu0 0.0
    %176 = vmatprep.subr.mxu0 0.0
    %177 = vmatpush1.msra.mxu0 0.0
    %178 = vmatprep.subr.mxu0 0.0
    %179 = vmatpush1.msra.mxu0 0.0
    %180 = vmatprep.subr.mxu0 0.0
    %181 = vmatpush1.msra.mxu0 0.0
    %182 = vmatprep.mubr.f32.mxu0 0.0
    %183 = vmatmul.mubr.f32.gmra.mrb[0].mxu0 %v109
    %v184 = vpop.f32.mrb[0].mxu0
    %v185 = vadd.f32 %v105, %v184
    %v186 = vpop.f32.mrb[0].mxu0
    %187 = vmatprep.mubr.f32.mxu0 0.0
    %188 = vmatmul.mubr.f32.gmra.mrb[0].mxu0 %v112
    %v189 = vpop.f32.mrb[0].mxu0
    %v190 = vadd.f32 %v105, %v189
    %v191 = vpop.f32.mrb[0].mxu0
    %192 = vdwg.mxu0
    %v193 = vld [vmem:[%s2] sm:$0xff]
    %v194 = vld [vmem:[%s2 + $0x8] sm:$0xff]
    %v195 = vld [vmem:[%s2 + $0x10] sm:$0xff]
    %v196 = vld [vmem:[%s2 + $0x18] sm:$0xff]
    %vm197 = vcmp.ge.s32.totalorder %v80, 64
    %vm198 = vcmp.lt.s32.totalorder %v80, 96
    %vm199 = vmand %vm197, %vm198
    %vm200 = vcmask 261120
    %v202 = vsel %vm200, 0.0, 0
    %204 = vmatprep.subr.mxu0 0.0
    %205 = vmatpush1.msra.mxu0 %v193
    %206 = vmatprep.subr.mxu0 0.0
    %207 = vmatpush1.msra.mxu0 %v194
    %208 = vmatprep.subr.mxu0 0.0
    %209 = vmatpush1.msra.mxu0 %v195
    %210 = vmatprep.subr.mxu0 0.0
    %211 = vmatpush1.msra.mxu0 %v196
    %212 = vmatprep.subr.mxu0 0.0
    %213 = vmatpush1.msra.mxu0 0.0
    %214 = vmatprep.subr.mxu0 0.0
    %215 = vmatpush1.msra.mxu0 0.0
    %216 = vmatprep.subr.mxu0 0.0
    %217 = vmatpush1.msra.mxu0 0.0
    %218 = vmatprep.subr.mxu0 0.0
    %219 = vmatpush1.msra.mxu0 0.0
    %220 = vmatprep.subr.mxu0 0.0
    %221 = vmatpush1.msra.mxu0 0.0
    %222 = vmatprep.subr.mxu0 0.0
    %223 = vmatpush1.msra.mxu0 0.0
    %224 = vmatprep.subr.mxu0 0.0
    %225 = vmatpush1.msra.mxu0 0.0
    %226 = vmatprep.subr.mxu0 0.0
    %227 = vmatpush1.msra.mxu0 0.0
    %228 = vmatprep.subr.mxu0 0.0
    %229 = vmatpush1.msra.mxu0 0.0
    %230 = vmatprep.subr.mxu0 0.0
    %231 = vmatpush1.msra.mxu0 0.0
    %232 = vmatprep.subr.mxu0 0.0
    %233 = vmatpush1.msra.mxu0 0.0
    %234 = vmatprep.subr.mxu0 0.0
    %235 = vmatpush1.msra.mxu0 0.0
    %236 = vmatprep.subr.mxu0 0.0
    %237 = vmatpush1.msra.mxu0 0.0
    %238 = vmatprep.subr.mxu0 0.0
    %239 = vmatpush1.msra.mxu0 0.0
    %240 = vmatprep.subr.mxu0 0.0
    %241 = vmatpush1.msra.mxu0 0.0
    %242 = vmatprep.subr.mxu0 0.0
    %243 = vmatpush1.msra.mxu0 0.0
    %244 = vmatprep.subr.mxu0 0.0
    %245 = vmatpush1.msra.mxu0 0.0
    %246 = vmatprep.subr.mxu0 0.0
    %247 = vmatpush1.msra.mxu0 0.0
    %248 = vmatprep.subr.mxu0 0.0
    %249 = vmatpush1.msra.mxu0 0.0
    %250 = vmatprep.subr.mxu0 0.0
    %251 = vmatpush1.msra.mxu0 0.0
    %252 = vmatprep.subr.mxu0 0.0
    %253 = vmatpush1.msra.mxu0 0.0
    %254 = vmatprep.subr.mxu0 0.0
    %255 = vmatpush1.msra.mxu0 0.0
    %256 = vmatprep.subr.mxu0 0.0
    %257 = vmatpush1.msra.mxu0 0.0
    %258 = vmatprep.subr.mxu0 0.0
    %259 = vmatpush1.msra.mxu0 0.0
    %260 = vmatprep.subr.mxu0 0.0
    %261 = vmatpush1.msra.mxu0 0.0
    %262 = vmatprep.subr.mxu0 0.0
    %263 = vmatpush1.msra.mxu0 0.0
    %264 = vmatprep.subr.mxu0 0.0
    %265 = vmatpush1.msra.mxu0 0.0
    %266 = vmatprep.subr.mxu0 0.0
    %267 = vmatpush1.msra.mxu0 0.0
    %268 = vmatprep.mubr.f32.mxu0 0.0
    %269 = vmatmul.mubr.f32.gmra.mrb[0].mxu0 %v202
    %v270 = vpop.f32.mrb[0].mxu0
    %v271 = vadd.f32 0.0, %v270
    %v272 = vpop.f32.mrb[0].mxu0
    %273 = vdwg.mxu0
    %v274 = vadd.f32 %v185, %v271
    %v275 = vxor.u32 %v274, 2147483648
    %v276 = vmul.f32 %v275, 1.442695
    %v277 = vpow.pop %v276
    %v278 = vadd.f32 %v277, 1.0
    %v279 = vrcp.pop %v278
    %v280 = vmul.f32 1.0, %v279
    %v281 = vmul.f32 %v280, 2.0
    %v282 = vsub.f32 %v281, 1.0
    %v283 = vsel %vm199, %v282, %v280
    %v284 = vmul.f32 %v283, 0.0
    %286 = vrot.lane.b32.xlu0 %v283, 64
    %v287 = vpop.permute.xlu0 %286
    %v289 = vmul.f32 %v283, %v287
    %291 = vrot.lane.b32.xlu0 %v289, 32
    %v292 = vpop.permute.xlu0 %291
    %v294 = vadd.f32 %v284, %v292
    %v295 = vtanh.pop %v294
    %297 = vrot.lane.b32.xlu0 %v295, 64
    %v298 = vpop.permute.xlu0 %297
    %v300 = vmul.f32 %v283, %v298
    %302 = vrot.lane.b32.xlu0 %v300, 32
    %v303 = vpop.permute.xlu0 %302
    %v304 = vsel %vm200, %v303, 0
    %306 = vmatprep.subr.mxu0 0.0
    %307 = vmatpush1.msra.mxu0 %v193
    %308 = vmatprep.subr.mxu0 0.0
    %309 = vmatpush1.msra.mxu0 %v194
    %310 = vmatprep.subr.mxu0 0.0
    %311 = vmatpush1.msra.mxu0 %v195
    %312 = vmatprep.subr.mxu0 0.0
    %313 = vmatpush1.msra.mxu0 %v196
    %314 = vmatprep.subr.mxu0 0.0
    %315 = vmatpush1.msra.mxu0 0.0
    %316 = vmatprep.subr.mxu0 0.0
    %317 = vmatpush1.msra.mxu0 0.0
    %318 = vmatprep.subr.mxu0 0.0
    %319 = vmatpush1.msra.mxu0 0.0
    %320 = vmatprep.subr.mxu0 0.0
    %321 = vmatpush1.msra.mxu0 0.0
    %322 = vmatprep.subr.mxu0 0.0
    %323 = vmatpush1.msra.mxu0 0.0
    %324 = vmatprep.subr.mxu0 0.0
    %325 = vmatpush1.msra.mxu0 0.0
    %326 = vmatprep.subr.mxu0 0.0
    %327 = vmatpush1.msra.mxu0 0.0
    %328 = vmatprep.subr.mxu0 0.0
    %329 = vmatpush1.msra.mxu0 0.0
    %330 = vmatprep.subr.mxu0 0.0
    %331 = vmatpush1.msra.mxu0 0.0
    %332 = vmatprep.subr.mxu0 0.0
    %333 = vmatpush1.msra.mxu0 0.0
    %334 = vmatprep.subr.mxu0 0.0
    %335 = vmatpush1.msra.mxu0 0.0
    %336 = vmatprep.subr.mxu0 0.0
    %337 = vmatpush1.msra.mxu0 0.0
    %338 = vmatprep.subr.mxu0 0.0
    %339 = vmatpush1.msra.mxu0 0.0
    %340 = vmatprep.subr.mxu0 0.0
    %341 = vmatpush1.msra.mxu0 0.0
    %342 = vmatprep.subr.mxu0 0.0
    %343 = vmatpush1.msra.mxu0 0.0
    %344 = vmatprep.subr.mxu0 0.0
    %345 = vmatpush1.msra.mxu0 0.0
    %346 = vmatprep.subr.mxu0 0.0
    %347 = vmatpush1.msra.mxu0 0.0
    %348 = vmatprep.subr.mxu0 0.0
    %349 = vmatpush1.msra.mxu0 0.0
    %350 = vmatprep.subr.mxu0 0.0
    %351 = vmatpush1.msra.mxu0 0.0
    %352 = vmatprep.subr.mxu0 0.0
    %353 = vmatpush1.msra.mxu0 0.0
    %354 = vmatprep.subr.mxu0 0.0
    %355 = vmatpush1.msra.mxu0 0.0
    %356 = vmatprep.subr.mxu0 0.0
    %357 = vmatpush1.msra.mxu0 0.0
    %358 = vmatprep.subr.mxu0 0.0
    %359 = vmatpush1.msra.mxu0 0.0
    %360 = vmatprep.subr.mxu0 0.0
    %361 = vmatpush1.msra.mxu0 0.0
    %362 = vmatprep.subr.mxu0 0.0
    %363 = vmatpush1.msra.mxu0 0.0
    %364 = vmatprep.subr.mxu0 0.0
    %365 = vmatpush1.msra.mxu0 0.0
    %366 = vmatprep.subr.mxu0 0.0
    %367 = vmatpush1.msra.mxu0 0.0
    %368 = vmatprep.subr.mxu0 0.0
    %369 = vmatpush1.msra.mxu0 0.0
    %370 = vmatprep.mubr.f32.mxu0 0.0
    %371 = vmatmul.mubr.f32.gmra.mrb[0].mxu0 %v304
    %v372 = vpop.f32.mrb[0].mxu0
    %v373 = vadd.f32 0.0, %v372
    %v374 = vpop.f32.mrb[0].mxu0
    %375 = vdwg.mxu0
    %v377 = vrot.slane %v373, 6
    %v379 = vadd.f32 %v185, %v377
    %v380 = vxor.u32 %v379, 2147483648
    %v381 = vmul.f32 %v380, 1.442695
    %v382 = vpow.pop %v381
    %v383 = vadd.f32 %v382, 1.0
    %v384 = vrcp.pop %v383
    %v385 = vmul.f32 1.0, %v384
    %v386 = vmul.f32 %v385, 2.0
    %v387 = vsub.f32 %v386, 1.0
    %v388 = vsel %vm199, %v387, %v385
    %v390 = vrot.slane %v294, 6
    %v392 = vmul.f32 %v388, %v390
    %394 = vrot.lane.b32.xlu0 %v388, 64
    %v395 = vpop.permute.xlu0 %394
    %v397 = vmul.f32 %v388, %v395
    %399 = vrot.lane.b32.xlu0 %v397, 32
    %v400 = vpop.permute.xlu0 %399
    %v402 = vadd.f32 %v392, %v400
    %v403 = vtanh.pop %v402
    %405 = vrot.lane.b32.xlu0 %v403, 64
    %v406 = vpop.permute.xlu0 %405
    %v408 = vmul.f32 %v388, %v406
    %v410 = vrot.slane %v408, 2
    %411 = vrot.lane.b32.xlu0 %v410, 32
    %v412 = vpop.permute.xlu0 %411
    %v413 = vsel %vm200, %v412, 0
    %415 = vmatprep.subr.mxu0 0.0
    %416 = vmatpush1.msra.mxu0 %v193
    %417 = vmatprep.subr.mxu0 0.0
    %418 = vmatpush1.msra.mxu0 %v194
    %419 = vmatprep.subr.mxu0 0.0
    %420 = vmatpush1.msra.mxu0 %v195
    %421 = vmatprep.subr.mxu0 0.0
    %422 = vmatpush1.msra.mxu0 %v196
    %423 = vmatprep.subr.mxu0 0.0
    %424 = vmatpush1.msra.mxu0 0.0
    %425 = vmatprep.subr.mxu0 0.0
    %426 = vmatpush1.msra.mxu0 0.0
    %427 = vmatprep.subr.mxu0 0.0
    %428 = vmatpush1.msra.mxu0 0.0
    %429 = vmatprep.subr.mxu0 0.0
    %430 = vmatpush1.msra.mxu0 0.0
    %431 = vmatprep.subr.mxu0 0.0
    %432 = vmatpush1.msra.mxu0 0.0
    %433 = vmatprep.subr.mxu0 0.0
    %434 = vmatpush1.msra.mxu0 0.0
    %435 = vmatprep.subr.mxu0 0.0
    %436 = vmatpush1.msra.mxu0 0.0
    %437 = vmatprep.subr.mxu0 0.0
    %438 = vmatpush1.msra.mxu0 0.0
    %439 = vmatprep.subr.mxu0 0.0
    %440 = vmatpush1.msra.mxu0 0.0
    %441 = vmatprep.subr.mxu0 0.0
    %442 = vmatpush1.msra.mxu0 0.0
    %443 = vmatprep.subr.mxu0 0.0
    %444 = vmatpush1.msra.mxu0 0.0
    %445 = vmatprep.subr.mxu0 0.0
    %446 = vmatpush1.msra.mxu0 0.0
    %447 = vmatprep.subr.mxu0 0.0
    %448 = vmatpush1.msra.mxu0 0.0
    %449 = vmatprep.subr.mxu0 0.0
    %450 = vmatpush1.msra.mxu0 0.0
    %451 = vmatprep.subr.mxu0 0.0
    %452 = vmatpush1.msra.mxu0 0.0
    %453 = vmatprep.subr.mxu0 0.0
    %454 = vmatpush1.msra.mxu0 0.0
    %455 = vmatprep.subr.mxu0 0.0
    %456 = vmatpush1.msra.mxu0 0.0
    %457 = vmatprep.subr.mxu0 0.0
    %458 = vmatpush1.msra.mxu0 0.0
    %459 = vmatprep.subr.mxu0 0.0
    %460 = vmatpush1.msra.mxu0 0.0
    %461 = vmatprep.subr.mxu0 0.0
    %462 = vmatpush1.msra.mxu0 0.0
    %463 = vmatprep.subr.mxu0 0.0
    %464 = vmatpush1.msra.mxu0 0.0
    %465 = vmatprep.subr.mxu0 0.0
    %466 = vmatpush1.msra.mxu0 0.0
    %467 = vmatprep.subr.mxu0 0.0
    %468 = vmatpush1.msra.mxu0 0.0
    %469 = vmatprep.subr.mxu0 0.0
    %470 = vmatpush1.msra.mxu0 0.0
    %471 = vmatprep.subr.mxu0 0.0
    %472 = vmatpush1.msra.mxu0 0.0
    %473 = vmatprep.subr.mxu0 0.0
    %474 = vmatpush1.msra.mxu0 0.0
    %475 = vmatprep.subr.mxu0 0.0
    %476 = vmatpush1.msra.mxu0 0.0
    %477 = vmatprep.subr.mxu0 0.0
    %478 = vmatpush1.msra.mxu0 0.0
    %479 = vmatprep.mubr.f32.mxu0 0.0
    %480 = vmatmul.mubr.f32.gmra.mrb[0].mxu0 %v413
    %v481 = vpop.f32.mrb[0].mxu0
    %v482 = vadd.f32 0.0, %v481
    %v483 = vpop.f32.mrb[0].mxu0
    %484 = vdwg.mxu0
    %v486 = vrot.slane %v482, 4
    %v488 = vadd.f32 %v185, %v486
    %v489 = vxor.u32 %v488, 2147483648
    %v490 = vmul.f32 %v489, 1.442695
    %v491 = vpow.pop %v490
    %v492 = vadd.f32 %v491, 1.0
    %v493 = vrcp.pop %v492
    %v494 = vmul.f32 1.0, %v493
    %v495 = vmul.f32 %v494, 2.0
    %v496 = vsub.f32 %v495, 1.0
    %v497 = vsel %vm199, %v496, %v494
    %v499 = vrot.slane %v402, 6
    %v501 = vmul.f32 %v497, %v499
    %503 = vrot.lane.b32.xlu0 %v497, 64
    %v504 = vpop.permute.xlu0 %503
    %v506 = vmul.f32 %v497, %v504
    %508 = vrot.lane.b32.xlu0 %v506, 32
    %v509 = vpop.permute.xlu0 %508
    %v511 = vadd.f32 %v501, %v509
    %v512 = vtanh.pop %v511
    %514 = vrot.lane.b32.xlu0 %v512, 64
    %v515 = vpop.permute.xlu0 %514
    %v517 = vmul.f32 %v497, %v515
    %v519 = vrot.slane %v517, 4
    %520 = vrot.lane.b32.xlu0 %v519, 32
    %v521 = vpop.permute.xlu0 %520
    %v522 = vsel %vm200, %v521, 0
    %524 = vmatprep.subr.mxu0 0.0
    %525 = vmatpush1.msra.mxu0 %v193
    %526 = vmatprep.subr.mxu0 0.0
    %527 = vmatpush1.msra.mxu0 %v194
    %528 = vmatprep.subr.mxu0 0.0
    %529 = vmatpush1.msra.mxu0 %v195
    %530 = vmatprep.subr.mxu0 0.0
    %531 = vmatpush1.msra.mxu0 %v196
    %532 = vmatprep.subr.mxu0 0.0
    %533 = vmatpush1.msra.mxu0 0.0
    %534 = vmatprep.subr.mxu0 0.0
    %535 = vmatpush1.msra.mxu0 0.0
    %536 = vmatprep.subr.mxu0 0.0
    %537 = vmatpush1.msra.mxu0 0.0
    %538 = vmatprep.subr.mxu0 0.0
    %539 = vmatpush1.msra.mxu0 0.0
    %540 = vmatprep.subr.mxu0 0.0
    %541 = vmatpush1.msra.mxu0 0.0
    %542 = vmatprep.subr.mxu0 0.0
    %543 = vmatpush1.msra.mxu0 0.0
    %544 = vmatprep.subr.mxu0 0.0
    %545 = vmatpush1.msra.mxu0 0.0
    %546 = vmatprep.subr.mxu0 0.0
    %547 = vmatpush1.msra.mxu0 0.0
    %548 = vmatprep.subr.mxu0 0.0
    %549 = vmatpush1.msra.mxu0 0.0
    %550 = vmatprep.subr.mxu0 0.0
    %551 = vmatpush1.msra.mxu0 0.0
    %552 = vmatprep.subr.mxu0 0.0
    %553 = vmatpush1.msra.mxu0 0.0
    %554 = vmatprep.subr.mxu0 0.0
    %555 = vmatpush1.msra.mxu0 0.0
    %556 = vmatprep.subr.mxu0 0.0
    %557 = vmatpush1.msra.mxu0 0.0
    %558 = vmatprep.subr.mxu0 0.0
    %559 = vmatpush1.msra.mxu0 0.0
    %560 = vmatprep.subr.mxu0 0.0
    %561 = vmatpush1.msra.mxu0 0.0
    %562 = vmatprep.subr.mxu0 0.0
    %563 = vmatpush1.msra.mxu0 0.0
    %564 = vmatprep.subr.mxu0 0.0
    %565 = vmatpush1.msra.mxu0 0.0
    %566 = vmatprep.subr.mxu0 0.0
    %567 = vmatpush1.msra.mxu0 0.0
    %568 = vmatprep.subr.mxu0 0.0
    %569 = vmatpush1.msra.mxu0 0.0
    %570 = vmatprep.subr.mxu0 0.0
    %571 = vmatpush1.msra.mxu0 0.0
    %572 = vmatprep.subr.mxu0 0.0
    %573 = vmatpush1.msra.mxu0 0.0
    %574 = vmatprep.subr.mxu0 0.0
    %575 = vmatpush1.msra.mxu0 0.0
    %576 = vmatprep.subr.mxu0 0.0
    %577 = vmatpush1.msra.mxu0 0.0
    %578 = vmatprep.subr.mxu0 0.0
    %579 = vmatpush1.msra.mxu0 0.0
    %580 = vmatprep.subr.mxu0 0.0
    %581 = vmatpush1.msra.mxu0 0.0
    %582 = vmatprep.subr.mxu0 0.0
    %583 = vmatpush1.msra.mxu0 0.0
    %584 = vmatprep.subr.mxu0 0.0
    %585 = vmatpush1.msra.mxu0 0.0
    %586 = vmatprep.subr.mxu0 0.0
    %587 = vmatpush1.msra.mxu0 0.0
    %588 = vmatprep.mubr.f32.mxu0 0.0
    %589 = vmatmul.mubr.f32.gmra.mrb[0].mxu0 %v522
    %v590 = vpop.f32.mrb[0].mxu0
    %v591 = vadd.f32 0.0, %v590
    %v592 = vpop.f32.mrb[0].mxu0
    %593 = vdwg.mxu0
    %v595 = vrot.slane %v591, 2
    %v597 = vadd.f32 %v185, %v595
    %v598 = vxor.u32 %v597, 2147483648
    %v599 = vmul.f32 %v598, 1.442695
    %v600 = vpow.pop %v599
    %v601 = vadd.f32 %v600, 1.0
    %v602 = vrcp.pop %v601
    %v603 = vmul.f32 1.0, %v602
    %v604 = vmul.f32 %v603, 2.0
    %v605 = vsub.f32 %v604, 1.0
    %v606 = vsel %vm199, %v605, %v603
    %v608 = vrot.slane %v511, 6
    %v610 = vmul.f32 %v606, %v608
    %612 = vrot.lane.b32.xlu0 %v606, 64
    %v613 = vpop.permute.xlu0 %612
    %v615 = vmul.f32 %v606, %v613
    %617 = vrot.lane.b32.xlu0 %v615, 32
    %v618 = vpop.permute.xlu0 %617
    %v620 = vadd.f32 %v610, %v618
    %v621 = vtanh.pop %v620
    %623 = vrot.lane.b32.xlu0 %v621, 64
    %v624 = vpop.permute.xlu0 %623
    %v626 = vmul.f32 %v606, %v624
    %v628 = vrot.slane %v626, 6
    %629 = vrot.lane.b32.xlu0 %v628, 32
    %v630 = vpop.permute.xlu0 %629
    %v631 = vsel %vm200, %v630, 0
    %633 = vmatprep.subr.mxu0 0.0
    %634 = vmatpush1.msra.mxu0 %v193
    %635 = vmatprep.subr.mxu0 0.0
    %636 = vmatpush1.msra.mxu0 %v194
    %637 = vmatprep.subr.mxu0 0.0
    %638 = vmatpush1.msra.mxu0 %v195
    %639 = vmatprep.subr.mxu0 0.0
    %640 = vmatpush1.msra.mxu0 %v196
    %641 = vmatprep.subr.mxu0 0.0
    %642 = vmatpush1.msra.mxu0 0.0
    %643 = vmatprep.subr.mxu0 0.0
    %644 = vmatpush1.msra.mxu0 0.0
    %645 = vmatprep.subr.mxu0 0.0
    %646 = vmatpush1.msra.mxu0 0.0
    %647 = vmatprep.subr.mxu0 0.0
    %648 = vmatpush1.msra.mxu0 0.0
    %649 = vmatprep.subr.mxu0 0.0
    %650 = vmatpush1.msra.mxu0 0.0
    %651 = vmatprep.subr.mxu0 0.0
    %652 = vmatpush1.msra.mxu0 0.0
    %653 = vmatprep.subr.mxu0 0.0
    %654 = vmatpush1.msra.mxu0 0.0
    %655 = vmatprep.subr.mxu0 0.0
    %656 = vmatpush1.msra.mxu0 0.0
    %657 = vmatprep.subr.mxu0 0.0
    %658 = vmatpush1.msra.mxu0 0.0
    %659 = vmatprep.subr.mxu0 0.0
    %660 = vmatpush1.msra.mxu0 0.0
    %661 = vmatprep.subr.mxu0 0.0
    %662 = vmatpush1.msra.mxu0 0.0
    %663 = vmatprep.subr.mxu0 0.0
    %664 = vmatpush1.msra.mxu0 0.0
    %665 = vmatprep.subr.mxu0 0.0
    %666 = vmatpush1.msra.mxu0 0.0
    %667 = vmatprep.subr.mxu0 0.0
    %668 = vmatpush1.msra.mxu0 0.0
    %669 = vmatprep.subr.mxu0 0.0
    %670 = vmatpush1.msra.mxu0 0.0
    %671 = vmatprep.subr.mxu0 0.0
    %672 = vmatpush1.msra.mxu0 0.0
    %673 = vmatprep.subr.mxu0 0.0
    %674 = vmatpush1.msra.mxu0 0.0
    %675 = vmatprep.subr.mxu0 0.0
    %676 = vmatpush1.msra.mxu0 0.0
    %677 = vmatprep.subr.mxu0 0.0
    %678 = vmatpush1.msra.mxu0 0.0
    %679 = vmatprep.subr.mxu0 0.0
    %680 = vmatpush1.msra.mxu0 0.0
    %681 = vmatprep.subr.mxu0 0.0
    %682 = vmatpush1.msra.mxu0 0.0
    %683 = vmatprep.subr.mxu0 0.0
    %684 = vmatpush1.msra.mxu0 0.0
    %685 = vmatprep.subr.mxu0 0.0
    %686 = vmatpush1.msra.mxu0 0.0
    %687 = vmatprep.subr.mxu0 0.0
    %688 = vmatpush1.msra.mxu0 0.0
    %689 = vmatprep.subr.mxu0 0.0
    %690 = vmatpush1.msra.mxu0 0.0
    %691 = vmatprep.subr.mxu0 0.0
    %692 = vmatpush1.msra.mxu0 0.0
    %693 = vmatprep.subr.mxu0 0.0
    %694 = vmatpush1.msra.mxu0 0.0
    %695 = vmatprep.subr.mxu0 0.0
    %696 = vmatpush1.msra.mxu0 0.0
    %697 = vmatprep.mubr.f32.mxu0 0.0
    %698 = vmatmul.mubr.f32.gmra.mrb[0].mxu0 %v631
    %v699 = vpop.f32.mrb[0].mxu0
    %v700 = vadd.f32 0.0, %v699
    %v701 = vpop.f32.mrb[0].mxu0
    %702 = vdwg.mxu0
    %v703 = vadd.f32 %v190, %v700
    %v704 = vxor.u32 %v703, 2147483648
    %v705 = vmul.f32 %v704, 1.442695
    %v706 = vpow.pop %v705
    %v707 = vadd.f32 %v706, 1.0
    %v708 = vrcp.pop %v707
    %v709 = vmul.f32 1.0, %v708
    %v710 = vmul.f32 %v709, 2.0
    %v711 = vsub.f32 %v710, 1.0
    %v712 = vsel %vm199, %v711, %v709
    %v714 = vrot.slane %v620, 6
    %v716 = vmul.f32 %v712, %v714
    %718 = vrot.lane.b32.xlu0 %v712, 64
    %v719 = vpop.permute.xlu0 %718
    %v721 = vmul.f32 %v712, %v719
    %723 = vrot.lane.b32.xlu0 %v721, 32
    %v724 = vpop.permute.xlu0 %723
    %v726 = vadd.f32 %v716, %v724
    %v727 = vtanh.pop %v726
    %729 = vrot.lane.b32.xlu0 %v727, 64
    %v730 = vpop.permute.xlu0 %729
    %v732 = vmul.f32 %v712, %v730
    %734 = vrot.lane.b32.xlu0 %v732, 32
    %v735 = vpop.permute.xlu0 %734
    %v736 = vsel %vm200, %v735, 0
    %738 = vmatprep.subr.mxu0 0.0
    %739 = vmatpush1.msra.mxu0 %v193
    %740 = vmatprep.subr.mxu0 0.0
    %741 = vmatpush1.msra.mxu0 %v194
    %742 = vmatprep.subr.mxu0 0.0
    %743 = vmatpush1.msra.mxu0 %v195
    %744 = vmatprep.subr.mxu0 0.0
    %745 = vmatpush1.msra.mxu0 %v196
    %746 = vmatprep.subr.mxu0 0.0
    %747 = vmatpush1.msra.mxu0 0.0
    %748 = vmatprep.subr.mxu0 0.0
    %749 = vmatpush1.msra.mxu0 0.0
    %750 = vmatprep.subr.mxu0 0.0
    %751 = vmatpush1.msra.mxu0 0.0
    %752 = vmatprep.subr.mxu0 0.0
    %753 = vmatpush1.msra.mxu0 0.0
    %754 = vmatprep.subr.mxu0 0.0
    %755 = vmatpush1.msra.mxu0 0.0
    %756 = vmatprep.subr.mxu0 0.0
    %757 = vmatpush1.msra.mxu0 0.0
    %758 = vmatprep.subr.mxu0 0.0
    %759 = vmatpush1.msra.mxu0 0.0
    %760 = vmatprep.subr.mxu0 0.0
    %761 = vmatpush1.msra.mxu0 0.0
    %762 = vmatprep.subr.mxu0 0.0
    %763 = vmatpush1.msra.mxu0 0.0
    %764 = vmatprep.subr.mxu0 0.0
    %765 = vmatpush1.msra.mxu0 0.0
    %766 = vmatprep.subr.mxu0 0.0
    %767 = vmatpush1.msra.mxu0 0.0
    %768 = vmatprep.subr.mxu0 0.0
    %769 = vmatpush1.msra.mxu0 0.0
    %770 = vmatprep.subr.mxu0 0.0
    %771 = vmatpush1.msra.mxu0 0.0
    %772 = vmatprep.subr.mxu0 0.0
    %773 = vmatpush1.msra.mxu0 0.0
    %774 = vmatprep.subr.mxu0 0.0
    %775 = vmatpush1.msra.mxu0 0.0
    %776 = vmatprep.subr.mxu0 0.0
    %777 = vmatpush1.msra.mxu0 0.0
    %778 = vmatprep.subr.mxu0 0.0
    %779 = vmatpush1.msra.mxu0 0.0
    %780 = vmatprep.subr.mxu0 0.0
    %781 = vmatpush1.msra.mxu0 0.0
    %782 = vmatprep.subr.mxu0 0.0
    %783 = vmatpush1.msra.mxu0 0.0
    %784 = vmatprep.subr.mxu0 0.0
    %785 = vmatpush1.msra.mxu0 0.0
    %786 = vmatprep.subr.mxu0 0.0
    %787 = vmatpush1.msra.mxu0 0.0
    %788 = vmatprep.subr.mxu0 0.0
    %789 = vmatpush1.msra.mxu0 0.0
    %790 = vmatprep.subr.mxu0 0.0
    %791 = vmatpush1.msra.mxu0 0.0
    %792 = vmatprep.subr.mxu0 0.0
    %793 = vmatpush1.msra.mxu0 0.0
    %794 = vmatprep.subr.mxu0 0.0
    %795 = vmatpush1.msra.mxu0 0.0
    %796 = vmatprep.subr.mxu0 0.0
    %797 = vmatpush1.msra.mxu0 0.0
    %798 = vmatprep.subr.mxu0 0.0
    %799 = vmatpush1.msra.mxu0 0.0
    %800 = vmatprep.subr.mxu0 0.0
    %801 = vmatpush1.msra.mxu0 0.0
    %802 = vmatprep.mubr.f32.mxu0 0.0
    %803 = vmatmul.mubr.f32.gmra.mrb[0].mxu0 %v736
    %v804 = vpop.f32.mrb[0].mxu0
    %v805 = vadd.f32 0.0, %v804
    %v806 = vpop.f32.mrb[0].mxu0
    %807 = vdwg.mxu0
    %v809 = vrot.slane %v805, 6
    %v811 = vadd.f32 %v190, %v809
    %v812 = vxor.u32 %v811, 2147483648
    %v813 = vmul.f32 %v812, 1.442695
    %v814 = vpow.pop %v813
    %v815 = vadd.f32 %v814, 1.0
    %v816 = vrcp.pop %v815
    %v817 = vmul.f32 1.0, %v816
    %v818 = vmul.f32 %v817, 2.0
    %v819 = vsub.f32 %v818, 1.0
    %v820 = vsel %vm199, %v819, %v817
    %v822 = vrot.slane %v726, 6
    %v824 = vmul.f32 %v820, %v822
    %826 = vrot.lane.b32.xlu0 %v820, 64
    %v827 = vpop.permute.xlu0 %826
    %v829 = vmul.f32 %v820, %v827
    %831 = vrot.lane.b32.xlu0 %v829, 32
    %v832 = vpop.permute.xlu0 %831
    %v834 = vadd.f32 %v824, %v832
    %v835 = vtanh.pop %v834
    %837 = vrot.lane.b32.xlu0 %v835, 64
    %v838 = vpop.permute.xlu0 %837
    %v840 = vmul.f32 %v820, %v838
    %v842 = vrot.slane %v840, 2
    %843 = vrot.lane.b32.xlu0 %v842, 32
    %v844 = vpop.permute.xlu0 %843
    %v845 = vsel %vm200, %v844, 0
    %847 = vmatprep.subr.mxu0 0.0
    %848 = vmatpush1.msra.mxu0 %v193
    %849 = vmatprep.subr.mxu0 0.0
    %850 = vmatpush1.msra.mxu0 %v194
    %851 = vmatprep.subr.mxu0 0.0
    %852 = vmatpush1.msra.mxu0 %v195
    %853 = vmatprep.subr.mxu0 0.0
    %854 = vmatpush1.msra.mxu0 %v196
    %855 = vmatprep.subr.mxu0 0.0
    %856 = vmatpush1.msra.mxu0 0.0
    %857 = vmatprep.subr.mxu0 0.0
    %858 = vmatpush1.msra.mxu0 0.0
    %859 = vmatprep.subr.mxu0 0.0
    %860 = vmatpush1.msra.mxu0 0.0
    %861 = vmatprep.subr.mxu0 0.0
    %862 = vmatpush1.msra.mxu0 0.0
    %863 = vmatprep.subr.mxu0 0.0
    %864 = vmatpush1.msra.mxu0 0.0
    %865 = vmatprep.subr.mxu0 0.0
    %866 = vmatpush1.msra.mxu0 0.0
    %867 = vmatprep.subr.mxu0 0.0
    %868 = vmatpush1.msra.mxu0 0.0
    %869 = vmatprep.subr.mxu0 0.0
    %870 = vmatpush1.msra.mxu0 0.0
    %871 = vmatprep.subr.mxu0 0.0
    %872 = vmatpush1.msra.mxu0 0.0
    %873 = vmatprep.subr.mxu0 0.0
    %874 = vmatpush1.msra.mxu0 0.0
    %875 = vmatprep.subr.mxu0 0.0
    %876 = vmatpush1.msra.mxu0 0.0
    %877 = vmatprep.subr.mxu0 0.0
    %878 = vmatpush1.msra.mxu0 0.0
    %879 = vmatprep.subr.mxu0 0.0
    %880 = vmatpush1.msra.mxu0 0.0
    %881 = vmatprep.subr.mxu0 0.0
    %882 = vmatpush1.msra.mxu0 0.0
    %883 = vmatprep.subr.mxu0 0.0
    %884 = vmatpush1.msra.mxu0 0.0
    %885 = vmatprep.subr.mxu0 0.0
    %886 = vmatpush1.msra.mxu0 0.0
    %887 = vmatprep.subr.mxu0 0.0
    %888 = vmatpush1.msra.mxu0 0.0
    %889 = vmatprep.subr.mxu0 0.0
    %890 = vmatpush1.msra.mxu0 0.0
    %891 = vmatprep.subr.mxu0 0.0
    %892 = vmatpush1.msra.mxu0 0.0
    %893 = vmatprep.subr.mxu0 0.0
    %894 = vmatpush1.msra.mxu0 0.0
    %895 = vmatprep.subr.mxu0 0.0
    %896 = vmatpush1.msra.mxu0 0.0
    %897 = vmatprep.subr.mxu0 0.0
    %898 = vmatpush1.msra.mxu0 0.0
    %899 = vmatprep.subr.mxu0 0.0
    %900 = vmatpush1.msra.mxu0 0.0
    %901 = vmatprep.subr.mxu0 0.0
    %902 = vmatpush1.msra.mxu0 0.0
    %903 = vmatprep.subr.mxu0 0.0
    %904 = vmatpush1.msra.mxu0 0.0
    %905 = vmatprep.subr.mxu0 0.0
    %906 = vmatpush1.msra.mxu0 0.0
    %907 = vmatprep.subr.mxu0 0.0
    %908 = vmatpush1.msra.mxu0 0.0
    %909 = vmatprep.subr.mxu0 0.0
    %910 = vmatpush1.msra.mxu0 0.0
    %911 = vmatprep.mubr.f32.mxu0 0.0
    %912 = vmatmul.mubr.f32.gmra.mrb[0].mxu0 %v845
    %v913 = vpop.f32.mrb[0].mxu0
    %v914 = vadd.f32 0.0, %v913
    %v915 = vpop.f32.mrb[0].mxu0
    %916 = vdwg.mxu0
    %v918 = vrot.slane %v914, 4
    %v920 = vadd.f32 %v190, %v918
    %v921 = vxor.u32 %v920, 2147483648
    %v922 = vmul.f32 %v921, 1.442695
    %v923 = vpow.pop %v922
    %v924 = vadd.f32 %v923, 1.0
    %v925 = vrcp.pop %v924
    %v926 = vmul.f32 1.0, %v925
    %v927 = vmul.f32 %v926, 2.0
    %v928 = vsub.f32 %v927, 1.0
    %v929 = vsel %vm199, %v928, %v926
    %v931 = vrot.slane %v834, 6
    %v933 = vmul.f32 %v929, %v931
    %935 = vrot.lane.b32.xlu0 %v929, 64
    %v936 = vpop.permute.xlu0 %935
    %v938 = vmul.f32 %v929, %v936
    %940 = vrot.lane.b32.xlu0 %v938, 32
    %v941 = vpop.permute.xlu0 %940
    %v943 = vadd.f32 %v933, %v941
    %v944 = vtanh.pop %v943
    %946 = vrot.lane.b32.xlu0 %v944, 64
    %v947 = vpop.permute.xlu0 %946
    %v949 = vmul.f32 %v929, %v947
    %v951 = vrot.slane %v949, 4
    %952 = vrot.lane.b32.xlu0 %v951, 32
    %v953 = vpop.permute.xlu0 %952
    %v954 = vsel %vm200, %v953, 0
    %956 = vmatprep.subr.mxu0 0.0
    %957 = vmatpush1.msra.mxu0 %v193
    %958 = vmatprep.subr.mxu0 0.0
    %959 = vmatpush1.msra.mxu0 %v194
    %960 = vmatprep.subr.mxu0 0.0
    %961 = vmatpush1.msra.mxu0 %v195
    %962 = vmatprep.subr.mxu0 0.0
    %963 = vmatpush1.msra.mxu0 %v196
    %964 = vmatprep.subr.mxu0 0.0
    %965 = vmatpush1.msra.mxu0 0.0
    %966 = vmatprep.subr.mxu0 0.0
    %967 = vmatpush1.msra.mxu0 0.0
    %968 = vmatprep.subr.mxu0 0.0
    %969 = vmatpush1.msra.mxu0 0.0
    %970 = vmatprep.subr.mxu0 0.0
    %971 = vmatpush1.msra.mxu0 0.0
    %972 = vmatprep.subr.mxu0 0.0
    %973 = vmatpush1.msra.mxu0 0.0
    %974 = vmatprep.subr.mxu0 0.0
    %975 = vmatpush1.msra.mxu0 0.0
    %976 = vmatprep.subr.mxu0 0.0
    %977 = vmatpush1.msra.mxu0 0.0
    %978 = vmatprep.subr.mxu0 0.0
    %979 = vmatpush1.msra.mxu0 0.0
    %980 = vmatprep.subr.mxu0 0.0
    %981 = vmatpush1.msra.mxu0 0.0
    %982 = vmatprep.subr.mxu0 0.0
    %983 = vmatpush1.msra.mxu0 0.0
    %984 = vmatprep.subr.mxu0 0.0
    %985 = vmatpush1.msra.mxu0 0.0
    %986 = vmatprep.subr.mxu0 0.0
    %987 = vmatpush1.msra.mxu0 0.0
    %988 = vmatprep.subr.mxu0 0.0
    %989 = vmatpush1.msra.mxu0 0.0
    %990 = vmatprep.subr.mxu0 0.0
    %991 = vmatpush1.msra.mxu0 0.0
    %992 = vmatprep.subr.mxu0 0.0
    %993 = vmatpush1.msra.mxu0 0.0
    %994 = vmatprep.subr.mxu0 0.0
    %995 = vmatpush1.msra.mxu0 0.0
    %996 = vmatprep.subr.mxu0 0.0
    %997 = vmatpush1.msra.mxu0 0.0
    %998 = vmatprep.subr.mxu0 0.0
    %999 = vmatpush1.msra.mxu0 0.0
    %1000 = vmatprep.subr.mxu0 0.0
    %1001 = vmatpush1.msra.mxu0 0.0
    %1002 = vmatprep.subr.mxu0 0.0
    %1003 = vmatpush1.msra.mxu0 0.0
    %1004 = vmatprep.subr.mxu0 0.0
    %1005 = vmatpush1.msra.mxu0 0.0
    %1006 = vmatprep.subr.mxu0 0.0
    %1007 = vmatpush1.msra.mxu0 0.0
    %1008 = vmatprep.subr.mxu0 0.0
    %1009 = vmatpush1.msra.mxu0 0.0
    %1010 = vmatprep.subr.mxu0 0.0
    %1011 = vmatpush1.msra.mxu0 0.0
    %1012 = vmatprep.subr.mxu0 0.0
    %1013 = vmatpush1.msra.mxu0 0.0
    %1014 = vmatprep.subr.mxu0 0.0
    %1015 = vmatpush1.msra.mxu0 0.0
    %1016 = vmatprep.subr.mxu0 0.0
    %1017 = vmatpush1.msra.mxu0 0.0
    %1018 = vmatprep.subr.mxu0 0.0
    %1019 = vmatpush1.msra.mxu0 0.0
    %1020 = vmatprep.mubr.f32.mxu0 0.0
    %1021 = vmatmul.mubr.f32.gmra.mrb[0].mxu0 %v954
    %v1022 = vpop.f32.mrb[0].mxu0
    %v1023 = vadd.f32 0.0, %v1022
    %v1024 = vpop.f32.mrb[0].mxu0
    %1025 = vdwg.mxu0
    %v1027 = vrot.slane %v1023, 2
    %v1029 = vadd.f32 %v190, %v1027
    %v1030 = vxor.u32 %v1029, 2147483648
    %v1031 = vmul.f32 %v1030, 1.442695
    %v1032 = vpow.pop %v1031
    %v1033 = vadd.f32 %v1032, 1.0
    %v1034 = vrcp.pop %v1033
    %v1035 = vmul.f32 1.0, %v1034
    %v1036 = vmul.f32 %v1035, 2.0
    %v1037 = vsub.f32 %v1036, 1.0
    %v1038 = vsel %vm199, %v1037, %v1035
    %v1040 = vrot.slane %v943, 6
    %v1042 = vmul.f32 %v1038, %v1040
    %1044 = vrot.lane.b32.xlu0 %v1038, 64
    %v1045 = vpop.permute.xlu0 %1044
    %v1047 = vmul.f32 %v1038, %v1045
    %1049 = vrot.lane.b32.xlu0 %v1047, 32
    %v1050 = vpop.permute.xlu0 %1049
    %v1052 = vadd.f32 %v1042, %v1050
    %v1053 = vtanh.pop %v1052
    %1055 = vrot.lane.b32.xlu0 %v1053, 64
    %v1056 = vpop.permute.xlu0 %1055
    %v1058 = vmul.f32 %v1038, %v1056
    %v1059 = vld [vmem:[#allocation5] sm:$0xff]
    %v1060 = vld [vmem:[#allocation5 + $0x8] sm:$0xff]
    %v1061 = vld [vmem:[#allocation5 + $0x10] sm:$0xff]
    %v1062 = vld [vmem:[#allocation5 + $0x18] sm:$0xff]
    %v1063 = vld [vmem:[%s5] sm:$0x1]
    %v1065 = vlaneseq
    %v1066 = vshrl.u32 %v1065, 7
    %v1067 = vsub.s32 0, %v1066
    %v1068 = vrot.slane %v1063, %v1067
    %v1071 = vrot.slane %v1058, 6
    %1072 = vrot.lane.b32.xlu0 %v1071, 32
    %v1073 = vpop.permute.xlu0 %1072
    %v1074 = vsel %vm200, %v1073, 0
    %1076 = vmatprep.subr.mxu0 0.0
    %1077 = vmatpush1.msra.mxu0 %v1059
    %1078 = vmatprep.subr.mxu0 0.0
    %1079 = vmatpush1.msra.mxu0 %v1060
    %1080 = vmatprep.subr.mxu0 0.0
    %1081 = vmatpush1.msra.mxu0 %v1061
    %1082 = vmatprep.subr.mxu0 0.0
    %1083 = vmatpush1.msra.mxu0 %v1062
    %1084 = vmatprep.subr.mxu0 0.0
    %1085 = vmatpush1.msra.mxu0 0.0
    %1086 = vmatprep.subr.mxu0 0.0
    %1087 = vmatpush1.msra.mxu0 0.0
    %1088 = vmatprep.subr.mxu0 0.0
    %1089 = vmatpush1.msra.mxu0 0.0
    %1090 = vmatprep.subr.mxu0 0.0
    %1091 = vmatpush1.msra.mxu0 0.0
    %1092 = vmatprep.subr.mxu0 0.0
    %1093 = vmatpush1.msra.mxu0 0.0
    %1094 = vmatprep.subr.mxu0 0.0
    %1095 = vmatpush1.msra.mxu0 0.0
    %1096 = vmatprep.subr.mxu0 0.0
    %1097 = vmatpush1.msra.mxu0 0.0
    %1098 = vmatprep.subr.mxu0 0.0
    %1099 = vmatpush1.msra.mxu0 0.0
    %1100 = vmatprep.subr.mxu0 0.0
    %1101 = vmatpush1.msra.mxu0 0.0
    %1102 = vmatprep.subr.mxu0 0.0
    %1103 = vmatpush1.msra.mxu0 0.0
    %1104 = vmatprep.subr.mxu0 0.0
    %1105 = vmatpush1.msra.mxu0 0.0
    %1106 = vmatprep.subr.mxu0 0.0
    %1107 = vmatpush1.msra.mxu0 0.0
    %1108 = vmatprep.subr.mxu0 0.0
    %1109 = vmatpush1.msra.mxu0 0.0
    %1110 = vmatprep.subr.mxu0 0.0
    %1111 = vmatpush1.msra.mxu0 0.0
    %1112 = vmatprep.subr.mxu0 0.0
    %1113 = vmatpush1.msra.mxu0 0.0
    %1114 = vmatprep.subr.mxu0 0.0
    %1115 = vmatpush1.msra.mxu0 0.0
    %1116 = vmatprep.subr.mxu0 0.0
    %1117 = vmatpush1.msra.mxu0 0.0
    %1118 = vmatprep.subr.mxu0 0.0
    %1119 = vmatpush1.msra.mxu0 0.0
    %1120 = vmatprep.subr.mxu0 0.0
    %1121 = vmatpush1.msra.mxu0 0.0
    %1122 = vmatprep.subr.mxu0 0.0
    %1123 = vmatpush1.msra.mxu0 0.0
    %1124 = vmatprep.subr.mxu0 0.0
    %1125 = vmatpush1.msra.mxu0 0.0
    %1126 = vmatprep.subr.mxu0 0.0
    %1127 = vmatpush1.msra.mxu0 0.0
    %1128 = vmatprep.subr.mxu0 0.0
    %1129 = vmatpush1.msra.mxu0 0.0
    %1130 = vmatprep.subr.mxu0 0.0
    %1131 = vmatpush1.msra.mxu0 0.0
    %1132 = vmatprep.subr.mxu0 0.0
    %1133 = vmatpush1.msra.mxu0 0.0
    %1134 = vmatprep.subr.mxu0 0.0
    %1135 = vmatpush1.msra.mxu0 0.0
    %1136 = vmatprep.subr.mxu0 0.0
    %1137 = vmatpush1.msra.mxu0 0.0
    %1138 = vmatprep.subr.mxu0 0.0
    %1139 = vmatpush1.msra.mxu0 0.0
    %1140 = vmatprep.mubr.f32.mxu0 0.0
    %1141 = vmatmul.mubr.f32.gmra.mrb[0].mxu0 %v1074
    %v1142 = vpop.f32.mrb[0].mxu0
    %v1143 = vadd.f32 %v1068, %v1142
    %v1144 = vpop.f32.mrb[0].mxu0
    %1145 = vdwg.mxu0
    %v1146 = vld [vmem:[#allocation7] sm:$0xff]
    %v1147 = vld [vmem:[#allocation7 + $0x8] sm:$0xff]
    %v1148 = vld [vmem:[#allocation7 + $0x10] sm:$0xff]
    %v1149 = vld [vmem:[#allocation7 + $0x18] sm:$0xff]
    %v1150 = vld [vmem:[#allocation7 + $0x20] sm:$0xff]
    %v1151 = vld [vmem:[#allocation7 + $0x28] sm:$0xff]
    %v1152 = vld [vmem:[#allocation7 + $0x30] sm:$0xff]
    %v1153 = vld [vmem:[#allocation7 + $0x38] sm:$0xff]
    %v1154 = vld [vmem:[#allocation7 + $0x40] sm:$0xff]
    %v1155 = vld [vmem:[#allocation7 + $0x48] sm:$0xff]
    %v1156 = vld [vmem:[#allocation7 + $0x50] sm:$0xff]
    %v1157 = vld [vmem:[#allocation7 + $0x58] sm:$0xff]
    %v1158 = vld [vmem:[#allocation7 + $0x60] sm:$0xff]
    %v1159 = vld [vmem:[#allocation7 + $0x68] sm:$0xff]
    %v1160 = vld [vmem:[#allocation7 + $0x70] sm:$0xff]
    %v1161 = vld [vmem:[#allocation7 + $0x78] sm:$0xff]
    %v1162 = vld [vmem:[#allocation7 + $0x80] sm:$0xff]
    %v1163 = vld [vmem:[#allocation7 + $0x88] sm:$0xff]
    %v1164 = vld [vmem:[#allocation7 + $0x90] sm:$0xff]
    %v1165 = vld [vmem:[#allocation7 + $0x98] sm:$0xff]
    %v1166 = vld [vmem:[#allocation7 + $0xa0] sm:$0xff]
    %v1167 = vld [vmem:[#allocation7 + $0xa8] sm:$0xff]
    %v1168 = vld [vmem:[#allocation7 + $0xb0] sm:$0xff]
    %v1169 = vld [vmem:[#allocation7 + $0xb8] sm:$0xff]
    %v1170 = vld [vmem:[%s7] sm:$0x3f]
    %v1172 = vlaneseq
    %v1173 = vshrl.u32 %v1172, 7
    %v1174 = vsub.s32 0, %v1173
    %v1175 = vrot.slane %v1170, %v1174
    %v1176 = vlaneseq
    %v1177 = vshrl.u32 %v1176, 7
    %v1178 = vsub.s32 1, %v1177
    %v1179 = vrot.slane %v1170, %v1178
    %v1180 = vlaneseq
    %v1181 = vshrl.u32 %v1180, 7
    %v1182 = vsub.s32 2, %v1181
    %v1183 = vrot.slane %v1170, %v1182
    %v1184 = vlaneseq
    %v1185 = vshrl.u32 %v1184, 7
    %v1186 = vsub.s32 3, %v1185
    %v1187 = vrot.slane %v1170, %v1186
    %v1188 = vlaneseq
    %v1189 = vshrl.u32 %v1188, 7
    %v1190 = vsub.s32 4, %v1189
    %v1191 = vrot.slane %v1170, %v1190
    %v1192 = vlaneseq
    %v1193 = vshrl.u32 %v1192, 7
    %v1194 = vsub.s32 5, %v1193
    %v1195 = vrot.slane %v1170, %v1194
    %v1203 = vsel %vm200, %v1143, 0
    %1205 = vmatprep.subr.mxu0 %v1147
    %1206 = vmatpush1.msra.mxu0 %v1146
    %1207 = vmatprep.subr.mxu0 %v1153
    %1208 = vmatpush1.msra.mxu0 %v1152
    %1209 = vmatprep.subr.mxu0 %v1159
    %1210 = vmatpush1.msra.mxu0 %v1158
    %1211 = vmatprep.subr.mxu0 %v1165
    %1212 = vmatpush1.msra.mxu0 %v1164
    %1213 = vmatprep.subr.mxu0 0.0
    %1214 = vmatpush1.msra.mxu0 0.0
    %1215 = vmatprep.subr.mxu0 0.0
    %1216 = vmatpush1.msra.mxu0 0.0
    %1217 = vmatprep.subr.mxu0 0.0
    %1218 = vmatpush1.msra.mxu0 0.0
    %1219 = vmatprep.subr.mxu0 0.0
    %1220 = vmatpush1.msra.mxu0 0.0
    %1221 = vmatprep.subr.mxu0 0.0
    %1222 = vmatpush1.msra.mxu0 0.0
    %1223 = vmatprep.subr.mxu0 0.0
    %1224 = vmatpush1.msra.mxu0 0.0
    %1225 = vmatprep.subr.mxu0 0.0
    %1226 = vmatpush1.msra.mxu0 0.0
    %1227 = vmatprep.subr.mxu0 0.0
    %1228 = vmatpush1.msra.mxu0 0.0
    %1229 = vmatprep.subr.mxu0 0.0
    %1230 = vmatpush1.msra.mxu0 0.0
    %1231 = vmatprep.subr.mxu0 0.0
    %1232 = vmatpush1.msra.mxu0 0.0
    %1233 = vmatprep.subr.mxu0 0.0
    %1234 = vmatpush1.msra.mxu0 0.0
    %1235 = vmatprep.subr.mxu0 0.0
    %1236 = vmatpush1.msra.mxu0 0.0
    %1237 = vmatprep.subr.mxu0 0.0
    %1238 = vmatpush1.msra.mxu0 0.0
    %1239 = vmatprep.subr.mxu0 0.0
    %1240 = vmatpush1.msra.mxu0 0.0
    %1241 = vmatprep.subr.mxu0 0.0
    %1242 = vmatpush1.msra.mxu0 0.0
    %1243 = vmatprep.subr.mxu0 0.0
    %1244 = vmatpush1.msra.mxu0 0.0
    %1245 = vmatprep.subr.mxu0 0.0
    %1246 = vmatpush1.msra.mxu0 0.0
    %1247 = vmatprep.subr.mxu0 0.0
    %1248 = vmatpush1.msra.mxu0 0.0
    %1249 = vmatprep.subr.mxu0 0.0
    %1250 = vmatpush1.msra.mxu0 0.0
    %1251 = vmatprep.subr.mxu0 0.0
    %1252 = vmatpush1.msra.mxu0 0.0
    %1253 = vmatprep.subr.mxu0 0.0
    %1254 = vmatpush1.msra.mxu0 0.0
    %1255 = vmatprep.subr.mxu0 0.0
    %1256 = vmatpush1.msra.mxu0 0.0
    %1257 = vmatprep.subr.mxu0 0.0
    %1258 = vmatpush1.msra.mxu0 0.0
    %1259 = vmatprep.subr.mxu0 0.0
    %1260 = vmatpush1.msra.mxu0 0.0
    %1261 = vmatprep.subr.mxu0 0.0
    %1262 = vmatpush1.msra.mxu0 0.0
    %1263 = vmatprep.subr.mxu0 0.0
    %1264 = vmatpush1.msra.mxu0 0.0
    %1265 = vmatprep.subr.mxu0 0.0
    %1266 = vmatpush1.msra.mxu0 0.0
    %1267 = vmatprep.subr.mxu0 0.0
    %1268 = vmatpush1.msra.mxu0 0.0
    %1269 = vmatprep.mubr.f32.mxu0 0.0
    %1270 = vmatmul.mubr.f32.gmra.mrb[0].mxu0 %v1203
    %v1271 = vpop.f32.mrb[0].mxu0
    %v1272 = vadd.f32 %v1175, %v1271
    %v1273 = vpop.f32.mrb[0].mxu0
    %v1274 = vadd.f32 %v1179, %v1273
    %1275 = vdwg.mxu0
    %1276 = vmatprep.subr.mxu0 %v1149
    %1277 = vmatpush1.msra.mxu0 %v1148
    %1278 = vmatprep.subr.mxu0 %v1155
    %1279 = vmatpush1.msra.mxu0 %v1154
    %1280 = vmatprep.subr.mxu0 %v1161
    %1281 = vmatpush1.msra.mxu0 %v1160
    %1282 = vmatprep.subr.mxu0 %v1167
    %1283 = vmatpush1.msra.mxu0 %v1166
    %1284 = vmatprep.subr.mxu0 0.0
    %1285 = vmatpush1.msra.mxu0 0.0
    %1286 = vmatprep.subr.mxu0 0.0
    %1287 = vmatpush1.msra.mxu0 0.0
    %1288 = vmatprep.subr.mxu0 0.0
    %1289 = vmatpush1.msra.mxu0 0.0
    %1290 = vmatprep.subr.mxu0 0.0
    %1291 = vmatpush1.msra.mxu0 0.0
    %1292 = vmatprep.subr.mxu0 0.0
    %1293 = vmatpush1.msra.mxu0 0.0
    %1294 = vmatprep.subr.mxu0 0.0
    %1295 = vmatpush1.msra.mxu0 0.0
    %1296 = vmatprep.subr.mxu0 0.0
    %1297 = vmatpush1.msra.mxu0 0.0
    %1298 = vmatprep.subr.mxu0 0.0
    %1299 = vmatpush1.msra.mxu0 0.0
    %1300 = vmatprep.subr.mxu0 0.0
    %1301 = vmatpush1.msra.mxu0 0.0
    %1302 = vmatprep.subr.mxu0 0.0
    %1303 = vmatpush1.msra.mxu0 0.0
    %1304 = vmatprep.subr.mxu0 0.0
    %1305 = vmatpush1.msra.mxu0 0.0
    %1306 = vmatprep.subr.mxu0 0.0
    %1307 = vmatpush1.msra.mxu0 0.0
    %1308 = vmatprep.subr.mxu0 0.0
    %1309 = vmatpush1.msra.mxu0 0.0
    %1310 = vmatprep.subr.mxu0 0.0
    %1311 = vmatpush1.msra.mxu0 0.0
    %1312 = vmatprep.subr.mxu0 0.0
    %1313 = vmatpush1.msra.mxu0 0.0
    %1314 = vmatprep.subr.mxu0 0.0
    %1315 = vmatpush1.msra.mxu0 0.0
    %1316 = vmatprep.subr.mxu0 0.0
    %1317 = vmatpush1.msra.mxu0 0.0
    %1318 = vmatprep.subr.mxu0 0.0
    %1319 = vmatpush1.msra.mxu0 0.0
    %1320 = vmatprep.subr.mxu0 0.0
    %1321 = vmatpush1.msra.mxu0 0.0
    %1322 = vmatprep.subr.mxu0 0.0
    %1323 = vmatpush1.msra.mxu0 0.0
    %1324 = vmatprep.subr.mxu0 0.0
    %1325 = vmatpush1.msra.mxu0 0.0
    %1326 = vmatprep.subr.mxu0 0.0
    %1327 = vmatpush1.msra.mxu0 0.0
    %1328 = vmatprep.subr.mxu0 0.0
    %1329 = vmatpush1.msra.mxu0 0.0
    %1330 = vmatprep.subr.mxu0 0.0
    %1331 = vmatpush1.msra.mxu0 0.0
    %1332 = vmatprep.subr.mxu0 0.0
    %1333 = vmatpush1.msra.mxu0 0.0
    %1334 = vmatprep.subr.mxu0 0.0
    %1335 = vmatpush1.msra.mxu0 0.0
    %1336 = vmatprep.subr.mxu0 0.0
    %1337 = vmatpush1.msra.mxu0 0.0
    %1338 = vmatprep.subr.mxu0 0.0
    %1339 = vmatpush1.msra.mxu0 0.0
    %1340 = vmatprep.mubr.f32.mxu0 0.0
    %1341 = vmatmul.mubr.f32.gmra.mrb[0].mxu0 %v1203
    %v1342 = vpop.f32.mrb[0].mxu0
    %v1343 = vadd.f32 %v1183, %v1342
    %v1344 = vpop.f32.mrb[0].mxu0
    %v1345 = vadd.f32 %v1187, %v1344
    %1346 = vdwg.mxu0
    %1347 = vmatprep.subr.mxu0 %v1151
    %1348 = vmatpush1.msra.mxu0 %v1150
    %1349 = vmatprep.subr.mxu0 %v1157
    %1350 = vmatpush1.msra.mxu0 %v1156
    %1351 = vmatprep.subr.mxu0 %v1163
    %1352 = vmatpush1.msra.mxu0 %v1162
    %1353 = vmatprep.subr.mxu0 %v1169
    %1354 = vmatpush1.msra.mxu0 %v1168
    %1355 = vmatprep.subr.mxu0 0.0
    %1356 = vmatpush1.msra.mxu0 0.0
    %1357 = vmatprep.subr.mxu0 0.0
    %1358 = vmatpush1.msra.mxu0 0.0
    %1359 = vmatprep.subr.mxu0 0.0
    %1360 = vmatpush1.msra.mxu0 0.0
    %1361 = vmatprep.subr.mxu0 0.0
    %1362 = vmatpush1.msra.mxu0 0.0
    %1363 = vmatprep.subr.mxu0 0.0
    %1364 = vmatpush1.msra.mxu0 0.0
    %1365 = vmatprep.subr.mxu0 0.0
    %1366 = vmatpush1.msra.mxu0 0.0
    %1367 = vmatprep.subr.mxu0 0.0
    %1368 = vmatpush1.msra.mxu0 0.0
    %1369 = vmatprep.subr.mxu0 0.0
    %1370 = vmatpush1.msra.mxu0 0.0
    %1371 = vmatprep.subr.mxu0 0.0
    %1372 = vmatpush1.msra.mxu0 0.0
    %1373 = vmatprep.subr.mxu0 0.0
    %1374 = vmatpush1.msra.mxu0 0.0
    %1375 = vmatprep.subr.mxu0 0.0
    %1376 = vmatpush1.msra.mxu0 0.0
    %1377 = vmatprep.subr.mxu0 0.0
    %1378 = vmatpush1.msra.mxu0 0.0
    %1379 = vmatprep.subr.mxu0 0.0
    %1380 = vmatpush1.msra.mxu0 0.0
    %1381 = vmatprep.subr.mxu0 0.0
    %1382 = vmatpush1.msra.mxu0 0.0
    %1383 = vmatprep.subr.mxu0 0.0
    %1384 = vmatpush1.msra.mxu0 0.0
    %1385 = vmatprep.subr.mxu0 0.0
    %1386 = vmatpush1.msra.mxu0 0.0
    %1387 = vmatprep.subr.mxu0 0.0
    %1388 = vmatpush1.msra.mxu0 0.0
    %1389 = vmatprep.subr.mxu0 0.0
    %1390 = vmatpush1.msra.mxu0 0.0
    %1391 = vmatprep.subr.mxu0 0.0
    %1392 = vmatpush1.msra.mxu0 0.0
    %1393 = vmatprep.subr.mxu0 0.0
    %1394 = vmatpush1.msra.mxu0 0.0
    %1395 = vmatprep.subr.mxu0 0.0
    %1396 = vmatpush1.msra.mxu0 0.0
    %1397 = vmatprep.subr.mxu0 0.0
    %1398 = vmatpush1.msra.mxu0 0.0
    %1399 = vmatprep.subr.mxu0 0.0
    %1400 = vmatpush1.msra.mxu0 0.0
    %1401 = vmatprep.subr.mxu0 0.0
    %1402 = vmatpush1.msra.mxu0 0.0
    %1403 = vmatprep.subr.mxu0 0.0
    %1404 = vmatpush1.msra.mxu0 0.0
    %1405 = vmatprep.subr.mxu0 0.0
    %1406 = vmatpush1.msra.mxu0 0.0
    %1407 = vmatprep.subr.mxu0 0.0
    %1408 = vmatpush1.msra.mxu0 0.0
    %1409 = vmatprep.subr.mxu0 0.0
    %1410 = vmatpush1.msra.mxu0 0.0
    %1411 = vmatprep.mubr.f32.mxu0 0.0
    %1412 = vmatmul.mubr.f32.gmra.mrb[0].mxu0 %v1203
    %v1413 = vpop.f32.mrb[0].mxu0
    %v1414 = vadd.f32 %v1191, %v1413
    %v1415 = vpop.f32.mrb[0].mxu0
    %v1416 = vadd.f32 %v1195, %v1415
    %1417 = vdwg.mxu0
    %v1418 = vmax.f32 %v1272, 0.0
    %v1419 = vmax.f32 %v1274, 0.0
    %v1420 = vmax.f32 %v1343, 0.0
    %v1421 = vmax.f32 %v1345, 0.0
    %v1422 = vmax.f32 %v1414, 0.0
    %v1423 = vmax.f32 %v1416, 0.0
    %1425 = vrot.lane.b32.xlu0 %v1418, 96
    %v1426 = vpop.permute.xlu0 %1425
    %1428 = vrot.lane.b32.xlu0 %v1418, 64
    %v1429 = vpop.permute.xlu0 %1428
    %1431 = vrot.lane.b32.xlu0 %v1418, 32
    %v1432 = vpop.permute.xlu0 %1431
    %1435 = vrot.lane.b32.xlu0 %v1419, 96
    %v1436 = vpop.permute.xlu0 %1435
    %1438 = vrot.lane.b32.xlu0 %v1419, 64
    %v1439 = vpop.permute.xlu0 %1438
    %1441 = vrot.lane.b32.xlu0 %v1419, 32
    %v1442 = vpop.permute.xlu0 %1441
    %1445 = vrot.lane.b32.xlu0 %v1420, 96
    %v1446 = vpop.permute.xlu0 %1445
    %1448 = vrot.lane.b32.xlu0 %v1420, 64
    %v1449 = vpop.permute.xlu0 %1448
    %1451 = vrot.lane.b32.xlu0 %v1420, 32
    %v1452 = vpop.permute.xlu0 %1451
    %1455 = vrot.lane.b32.xlu0 %v1421, 96
    %v1456 = vpop.permute.xlu0 %1455
    %1458 = vrot.lane.b32.xlu0 %v1421, 64
    %v1459 = vpop.permute.xlu0 %1458
    %1461 = vrot.lane.b32.xlu0 %v1421, 32
    %v1462 = vpop.permute.xlu0 %1461
    %1465 = vrot.lane.b32.xlu0 %v1422, 96
    %v1466 = vpop.permute.xlu0 %1465
    %1468 = vrot.lane.b32.xlu0 %v1422, 64
    %v1469 = vpop.permute.xlu0 %1468
    %1471 = vrot.lane.b32.xlu0 %v1422, 32
    %v1472 = vpop.permute.xlu0 %1471
    %1475 = vrot.lane.b32.xlu0 %v1423, 96
    %v1476 = vpop.permute.xlu0 %1475
    %1478 = vrot.lane.b32.xlu0 %v1423, 64
    %v1479 = vpop.permute.xlu0 %1478
    %1481 = vrot.lane.b32.xlu0 %v1423, 32
    %v1482 = vpop.permute.xlu0 %1481
    %v1484 = vcombine.low %v1418, %v1429
    %v1486 = vunpack.c.l.s4 1983009808
    %v1487 = vunpack.c.0.s8 %v1486
    %v1488 = vlaneseq
    %v1489 = vshrl.u32 %v1488, 7
    %v1490 = vsub.s32 %v1487, %v1489
    %v1491 = vrot.slane %v1484, %v1490
    %v1492 = vcombine.low %v1426, %v1432
    %v1494 = vunpack.c.l.s4 1983009808
    %v1495 = vunpack.c.0.s8 %v1494
    %v1496 = vlaneseq
    %v1497 = vshrl.u32 %v1496, 7
    %v1498 = vsub.s32 %v1495, %v1497
    %v1499 = vrot.slane %v1492, %v1498
    %v1500 = vcombine.low %v1419, %v1439
    %v1502 = vunpack.c.l.s4 1983009808
    %v1503 = vunpack.c.0.s8 %v1502
    %v1504 = vlaneseq
    %v1505 = vshrl.u32 %v1504, 7
    %v1506 = vsub.s32 %v1503, %v1505
    %v1507 = vrot.slane %v1500, %v1506
    %v1508 = vcombine.low %v1436, %v1442
    %v1510 = vunpack.c.l.s4 1983009808
    %v1511 = vunpack.c.0.s8 %v1510
    %v1512 = vlaneseq
    %v1513 = vshrl.u32 %v1512, 7
    %v1514 = vsub.s32 %v1511, %v1513
    %v1515 = vrot.slane %v1508, %v1514
    %v1516 = vcombine.low %v1491, %v1499
    %v1518 = vunpack.c.l.s4 1934713408
    %v1519 = vunpack.c.0.s8 %v1518
    %v1520 = vlaneseq
    %v1521 = vshrl.u32 %v1520, 7
    %v1522 = vsub.s32 %v1519, %v1521
    %v1523 = vrot.slane %v1516, %v1522
    %v1524 = vcombine.low %v1507, %v1515
    %v1526 = vunpack.c.l.s4 1934713408
    %v1527 = vunpack.c.0.s8 %v1526
    %v1528 = vlaneseq
    %v1529 = vshrl.u32 %v1528, 7
    %v1530 = vsub.s32 %v1527, %v1529
    %v1531 = vrot.slane %v1524, %v1530
    %v1532 = vcombine.low %v1523, %v1531
    %v1533 = vcombine.high %v1523, %v1531
    %v1534 = vcombine.low %v1420, %v1449
    %v1536 = vunpack.c.l.s4 1983009808
    %v1537 = vunpack.c.0.s8 %v1536
    %v1538 = vlaneseq
    %v1539 = vshrl.u32 %v1538, 7
    %v1540 = vsub.s32 %v1537, %v1539
    %v1541 = vrot.slane %v1534, %v1540
    %v1542 = vcombine.low %v1446, %v1452
    %v1544 = vunpack.c.l.s4 1983009808
    %v1545 = vunpack.c.0.s8 %v1544
    %v1546 = vlaneseq
    %v1547 = vshrl.u32 %v1546, 7
    %v1548 = vsub.s32 %v1545, %v1547
    %v1549 = vrot.slane %v1542, %v1548
    %v1550 = vcombine.low %v1421, %v1459
    %v1552 = vunpack.c.l.s4 1983009808
    %v1553 = vunpack.c.0.s8 %v1552
    %v1554 = vlaneseq
    %v1555 = vshrl.u32 %v1554, 7
    %v1556 = vsub.s32 %v1553, %v1555
    %v1557 = vrot.slane %v1550, %v1556
    %v1558 = vcombine.low %v1456, %v1462
    %v1560 = vunpack.c.l.s4 1983009808
    %v1561 = vunpack.c.0.s8 %v1560
    %v1562 = vlaneseq
    %v1563 = vshrl.u32 %v1562, 7
    %v1564 = vsub.s32 %v1561, %v1563
    %v1565 = vrot.slane %v1558, %v1564
    %v1566 = vcombine.low %v1541, %v1549
    %v1568 = vunpack.c.l.s4 1934713408
    %v1569 = vunpack.c.0.s8 %v1568
    %v1570 = vlaneseq
    %v1571 = vshrl.u32 %v1570, 7
    %v1572 = vsub.s32 %v1569, %v1571
    %v1573 = vrot.slane %v1566, %v1572
    %v1574 = vcombine.low %v1557, %v1565
    %v1576 = vunpack.c.l.s4 1934713408
    %v1577 = vunpack.c.0.s8 %v1576
    %v1578 = vlaneseq
    %v1579 = vshrl.u32 %v1578, 7
    %v1580 = vsub.s32 %v1577, %v1579
    %v1581 = vrot.slane %v1574, %v1580
    %v1582 = vcombine.low %v1573, %v1581
    %v1583 = vcombine.high %v1573, %v1581
    %v1584 = vcombine.low %v1422, %v1469
    %v1586 = vunpack.c.l.s4 1983009808
    %v1587 = vunpack.c.0.s8 %v1586
    %v1588 = vlaneseq
    %v1589 = vshrl.u32 %v1588, 7
    %v1590 = vsub.s32 %v1587, %v1589
    %v1591 = vrot.slane %v1584, %v1590
    %v1592 = vcombine.low %v1466, %v1472
    %v1594 = vunpack.c.l.s4 1983009808
    %v1595 = vunpack.c.0.s8 %v1594
    %v1596 = vlaneseq
    %v1597 = vshrl.u32 %v1596, 7
    %v1598 = vsub.s32 %v1595, %v1597
    %v1599 = vrot.slane %v1592, %v1598
    %v1600 = vcombine.low %v1423, %v1479
    %v1602 = vunpack.c.l.s4 1983009808
    %v1603 = vunpack.c.0.s8 %v1602
    %v1604 = vlaneseq
    %v1605 = vshrl.u32 %v1604, 7
    %v1606 = vsub.s32 %v1603, %v1605
    %v1607 = vrot.slane %v1600, %v1606
    %v1608 = vcombine.low %v1476, %v1482
    %v1610 = vunpack.c.l.s4 1983009808
    %v1611 = vunpack.c.0.s8 %v1610
    %v1612 = vlaneseq
    %v1613 = vshrl.u32 %v1612, 7
    %v1614 = vsub.s32 %v1611, %v1613
    %v1615 = vrot.slane %v1608, %v1614
    %v1616 = vcombine.low %v1591, %v1599
    %v1618 = vunpack.c.l.s4 1934713408
    %v1619 = vunpack.c.0.s8 %v1618
    %v1620 = vlaneseq
    %v1621 = vshrl.u32 %v1620, 7
    %v1622 = vsub.s32 %v1619, %v1621
    %v1623 = vrot.slane %v1616, %v1622
    %v1624 = vcombine.low %v1607, %v1615
    %v1626 = vunpack.c.l.s4 1934713408
    %v1627 = vunpack.c.0.s8 %v1626
    %v1628 = vlaneseq
    %v1629 = vshrl.u32 %v1628, 7
    %v1630 = vsub.s32 %v1627, %v1629
    %v1631 = vrot.slane %v1624, %v1630
    %v1632 = vcombine.low %v1623, %v1631
    %v1633 = vcombine.high %v1623, %v1631
    %v1634 = vsel %vm200, %v1532, -inf
    %1635 = vmax.xlane.f32.xlu0 %v1634
    %v1636 = vpop.xlane.xlu0 %1635
    %v1637 = vsel %vm200, %v1582, -inf
    %1638 = vmax.xlane.f32.xlu0 %v1637
    %v1639 = vpop.xlane.xlu0 %1638
    %v1640 = vsel %vm200, %v1632, -inf
    %1641 = vmax.xlane.f32.xlu0 %v1640
    %v1642 = vpop.xlane.xlu0 %1641
    %v1643 = vsel %vm200, %v1533, -inf
    %1644 = vmax.xlane.f32.xlu0 %v1643
    %v1645 = vpop.xlane.xlu0 %1644
    %v1646 = vsel %vm200, %v1583, -inf
    %1647 = vmax.xlane.f32.xlu0 %v1646
    %v1648 = vpop.xlane.xlu0 %1647
    %v1649 = vsel %vm200, %v1633, -inf
    %1650 = vmax.xlane.f32.xlu0 %v1649
    %v1651 = vpop.xlane.xlu0 %1650
    %v1652 = vld [vmem:[%s8] sm:$0xff]
    %v1653 = vld [vmem:[%s8 + $0x8] sm:$0xff]
    %v1654 = vld [vmem:[%s8 + $0x10] sm:$0xff]
    %v1655 = vld [vmem:[%s9] sm:$0x1]
    %v1657 = vlaneseq
    %v1658 = vshrl.u32 %v1657, 7
    %v1659 = vsub.s32 0, %v1658
    %v1660 = vrot.slane %v1655, %v1659
    %v1668 = vlaneseq
    %v1669 = vshrl.u32 %v1668, 7
    %v1670 = vsub.s32 %v80, %v1669
    %v1671 = vrot.slane %v1636, %v1670
    %v1672 = vadd.s32 %v80, 4294967288
    %v1673 = vlaneseq
    %v1674 = vshrl.u32 %v1673, 7
    %v1675 = vsub.s32 %v1672, %v1674
    %v1676 = vrot.slane %v1639, %v1675
    %vm1677 = vcmask 130112
    %v1678 = vsel %vm1677, %v1676, %v1671
    %v1679 = vadd.s32 %v80, 4294967280
    %v1680 = vlaneseq
    %v1681 = vshrl.u32 %v1680, 7
    %v1682 = vsub.s32 %v1679, %v1681
    %v1683 = vrot.slane %v1642, %v1682
    %vm1684 = vcmask 195712
    %v1685 = vsel %vm1684, %v1683, %v1678
    %v1686 = vlaneseq
    %v1687 = vshrl.u32 %v1686, 7
    %v1688 = vsub.s32 %v80, %v1687
    %v1689 = vrot.slane %v1645, %v1688
    %v1690 = vlaneseq
    %v1691 = vshrl.u32 %v1690, 7
    %v1692 = vsub.s32 %v1672, %v1691
    %v1693 = vrot.slane %v1648, %v1692
    %v1694 = vsel %vm1677, %v1693, %v1689
    %v1695 = vlaneseq
    %v1696 = vshrl.u32 %v1695, 7
    %v1697 = vsub.s32 %v1679, %v1696
    %v1698 = vrot.slane %v1651, %v1697
    %v1699 = vsel %vm1684, %v1698, %v1694
    %vm1700 = vcmask 1041409
    %v1701 = vsel %vm1700, %v1699, %v1685
    %vm1702 = vcmask 195584
    %v1703 = vsel %vm1702, %v1701, 0
    %1705 = vmatprep.subr.mxu0 0.0
    %1706 = vmatpush1.msra.mxu0 %v1652
    %1707 = vmatprep.subr.mxu0 0.0
    %1708 = vmatpush1.msra.mxu0 %v1653
    %1709 = vmatprep.subr.mxu0 0.0
    %1710 = vmatpush1.msra.mxu0 %v1654
    %1711 = vmatprep.subr.mxu0 0.0
    %1712 = vmatpush1.msra.mxu0 0.0
    %1713 = vmatprep.subr.mxu0 0.0
    %1714 = vmatpush1.msra.mxu0 0.0
    %1715 = vmatprep.subr.mxu0 0.0
    %1716 = vmatpush1.msra.mxu0 0.0
    %1717 = vmatprep.subr.mxu0 0.0
    %1718 = vmatpush1.msra.mxu0 0.0
    %1719 = vmatprep.subr.mxu0 0.0
    %1720 = vmatpush1.msra.mxu0 0.0
    %1721 = vmatprep.subr.mxu0 0.0
    %1722 = vmatpush1.msra.mxu0 0.0
    %1723 = vmatprep.subr.mxu0 0.0
    %1724 = vmatpush1.msra.mxu0 0.0
    %1725 = vmatprep.subr.mxu0 0.0
    %1726 = vmatpush1.msra.mxu0 0.0
    %1727 = vmatprep.subr.mxu0 0.0
    %1728 = vmatpush1.msra.mxu0 0.0
    %1729 = vmatprep.subr.mxu0 0.0
    %1730 = vmatpush1.msra.mxu0 0.0
    %1731 = vmatprep.subr.mxu0 0.0
    %1732 = vmatpush1.msra.mxu0 0.0
    %1733 = vmatprep.subr.mxu0 0.0
    %1734 = vmatpush1.msra.mxu0 0.0
    %1735 = vmatprep.subr.mxu0 0.0
    %1736 = vmatpush1.msra.mxu0 0.0
    %1737 = vmatprep.subr.mxu0 0.0
    %1738 = vmatpush1.msra.mxu0 0.0
    %1739 = vmatprep.subr.mxu0 0.0
    %1740 = vmatpush1.msra.mxu0 0.0
    %1741 = vmatprep.subr.mxu0 0.0
    %1742 = vmatpush1.msra.mxu0 0.0
    %1743 = vmatprep.subr.mxu0 0.0
    %1744 = vmatpush1.msra.mxu0 0.0
    %1745 = vmatprep.subr.mxu0 0.0
    %1746 = vmatpush1.msra.mxu0 0.0
    %1747 = vmatprep.subr.mxu0 0.0
    %1748 = vmatpush1.msra.mxu0 0.0
    %1749 = vmatprep.subr.mxu0 0.0
    %1750 = vmatpush1.msra.mxu0 0.0
    %1751 = vmatprep.subr.mxu0 0.0
    %1752 = vmatpush1.msra.mxu0 0.0
    %1753 = vmatprep.subr.mxu0 0.0
    %1754 = vmatpush1.msra.mxu0 0.0
    %1755 = vmatprep.subr.mxu0 0.0
    %1756 = vmatpush1.msra.mxu0 0.0
    %1757 = vmatprep.subr.mxu0 0.0
    %1758 = vmatpush1.msra.mxu0 0.0
    %1759 = vmatprep.subr.mxu0 0.0
    %1760 = vmatpush1.msra.mxu0 0.0
    %1761 = vmatprep.subr.mxu0 0.0
    %1762 = vmatpush1.msra.mxu0 0.0
    %1763 = vmatprep.subr.mxu0 0.0
    %1764 = vmatpush1.msra.mxu0 0.0
    %1765 = vmatprep.subr.mxu0 0.0
    %1766 = vmatpush1.msra.mxu0 0.0
    %1767 = vmatprep.subr.mxu0 0.0
    %1768 = vmatpush1.msra.mxu0 0.0
    %1769 = vmatprep.mubr.f32.mxu0 0.0
    %1770 = vmatmul.mubr.f32.gmra.mrb[0].mxu0 %v1703
    %v1771 = vpop.f32.mrb[0].mxu0
    %v1772 = vadd.f32 %v1660, %v1771
    %v1773 = vpop.f32.mrb[0].mxu0
    %1774 = vdwg.mxu0
    %v1775 = vxor.u32 %v1772, 2147483648
    %v1776 = vmul.f32 %v1775, 1.442695
    %v1777 = vpow.pop %v1776
    %v1778 = vadd.f32 %v1777, 1.0
    %v1779 = vrcp.pop %v1778
    %v1780 = vmul.f32 1.0, %v1779
    %vm1781 = vcmask 9216
    %1782 = vst.msk [vmem:[#allocation8] sm:$0x3] %vm1781, %v1780
    // Predicated region
    $region54: #{tpu_custom_call.1} parent=1 // pred_check
      _
    $region55: #{tpu_custom_call.1} parent=1 // pred_check_branch
      %1784 = sbr.rel (0) target = $region57
    $region56: #{tpu_custom_call.1} parent=1 // pred_region
      %s1786 = ssub.s32 32, 32
      %1787 = vsyncadd [#allocation4], %s1786
      %s1789 = sshll.u32 [#allocation8], 4
      %s1790 = int_to_ptr.vmem [resolvable:$true] %s1789
      %1792 = dma.vmem_to_hbm [thread:$0]  %s1790, 32, %s10, [#allocation4]
    $region57: #{tpu_custom_call.1} parent=1 // pred_fallthru
      _
    // Predicated region
    $region58: #{tpu_custom_call.1} parent=1 // pred_check
      _
    $region59: #{tpu_custom_call.1} parent=1 // pred_check_branch
      %1794 = sbr.rel (0) target = $region61
    $region60: #{tpu_custom_call.1} parent=1 // pred_region
      %1795 = dma.done [#allocation4], 32
    $region61: #{tpu_custom_call.1} parent=1 // pred_fallthru
      _
    %1796 = vsyncpa [#allocation3], 1
    %1797 = vsyncpa [#allocation6], 1
    %1798 = vsyncpa [#allocation4], 1

</llo_original>
